<compile_context>
chip_gen: v6e
topology: v6e:2x2x1
jax: 0.10.0
libtpu: 0.0.40
codegen_flags: <defaults>
</compile_context>

<pallas_src>
import numpy as np

import jax
import jax.numpy as jnp
from jax import lax
from jax.experimental import pallas as pl
from jax.experimental.pallas import tpu as pltpu

EPS = 1e-5    # torch.nn.GroupNorm default eps
OFF = 128     # lane offset of the image interior inside the flat padded scratch
              # (multiple of 128 so interior / halo stores are lane-aligned)


# ---------------- in-kernel helpers ----------------

def _silu(v):
    return v * jax.nn.sigmoid(v)


def _group_combine(v, G, gs):
    # (C, 1) per-channel partial sums -> per-group totals broadcast back (C, 1).
    C = G * gs
    vg = v.reshape(G, gs)
    m = jnp.sum(vg, axis=1, keepdims=True)
    return jnp.broadcast_to(m, (G, gs)).reshape(C, 1)


def _group_norm(h, gamma, beta, G):
    # h: (C, HW) f32, gamma/beta: (C, 1).  Two-pass stats (torch parity).
    C, HW = h.shape
    gs = C // G
    cnt = float(gs * HW)
    s1 = jnp.sum(h, axis=1, keepdims=True)              # (C, 1)
    if gs > 1:
        s1 = _group_combine(s1, G, gs)
    mean = s1 / cnt
    d = h - mean
    s2 = jnp.sum(d * d, axis=1, keepdims=True)          # (C, 1)
    if gs > 1:
        s2 = _group_combine(s2, G, gs)
    var = s2 / cnt
    return d * lax.rsqrt(var + EPS) * gamma + beta


# ---------------- pallas_call wrapper ----------------

def make_resblock_call(N, H, W, C, Cout, G, B_blk):
    assert Cout == C, "default out_channel == channels path"
    assert C % G == 0
    assert N % B_blk == 0
    assert OFF >= W + 1, "halo must cover one padded image row"
    HW = H * W
    PADW = OFF + HW + OFF         # aligned left / right halos (bf16 scratch)
    K9 = 9 * C

    def kernel(x_ref, eo_ref, gn1_g, gn1_b, w1, b1,
               gn2_g, gn2_b, w2, b2, out_ref, pad_scr, stk_scr):
        # Boundary masks along the flattened-spatial (lane) axis, hoisted once
        # per grid step and kept narrow (1, HW); jnp.where broadcasts them.
        pos = lax.broadcasted_iota(jnp.int32, (1, HW), 1)
        xq = pos % W
        m_left = xq >= 1            # tap valid when dx == -1
        m_right = xq <= W - 2       # tap valid when dx == +1

        # Zero only the halo lanes (aligned 128-lane bf16 stores), once per
        # step.  The interior is fully overwritten each conv.  Unconditional
        # -> safe with "parallel" megacore sharding.
        pad_scr[:, 0:OFF] = jnp.zeros((C, OFF), jnp.bfloat16)
        pad_scr[:, OFF + HW:PADW] = jnp.zeros((C, PADW - OFF - HW), jnp.bfloat16)

        def conv3x3(h, w_ref, b_ref):
            # h: (C, HW) f32 -> (Cout, HW) f32; one K=9*C MXU matmul (bf16 in,
            # f32 accumulate).  Single f32->bf16 cast at the interior store.
            pad_scr[:, OFF:OFF + HW] = h.astype(jnp.bfloat16)
            t = 0
            for dy in (-1, 0, 1):
                for dx in (-1, 0, 1):
                    s = dy * W + dx
                    tap = pad_scr[:, OFF + s:OFF + s + HW]  # (C, HW) bf16 view
                    if dx == -1:
                        tap = jnp.where(m_left, tap, 0.0)   # bitwise select
                    elif dx == 1:
                        tap = jnp.where(m_right, tap, 0.0)
                    # sublane-aligned bf16 store into the tap stack
                    stk_scr[t * C:(t + 1) * C, :] = tap
                    t += 1
            y = jnp.dot(w_ref[...], stk_scr[...],
                        preferred_element_type=jnp.float32)  # (Cout, HW) f32
            return y + b_ref[...]

        for b in range(B_blk):      # static unroll over samples in the block
            # in_layers: GroupNorm -> SiLU -> Conv3x3  (x not kept live)
            h = _group_norm(x_ref[b], gn1_g[...], gn1_b[...], G)
            h = _silu(h)
            h = conv3x3(h, w1, b1)

            # emb_layers output precomputed in the wrapper: (Cout, 1) column
            h = h + eo_ref[b]

            # out_layers: GroupNorm -> SiLU -> Dropout(inference=id) -> Conv3x3
            h = _group_norm(h, gn2_g[...], gn2_b[...], G)
            h = _silu(h)
            h = conv3x3(h, w2, b2)

            # skip_connection is Identity; re-read x from VMEM at the epilogue
            out_ref[b] = x_ref[b] + h

    in_specs = [
        pl.BlockSpec((B_blk, C, HW), lambda n: (n, 0, 0)),     # x  (C, HW per sample)
        pl.BlockSpec((B_blk, Cout, 1), lambda n: (n, 0, 0)),   # precomputed emb_out
        pl.BlockSpec((C, 1), lambda n: (0, 0)),                # gn1 gamma
        pl.BlockSpec((C, 1), lambda n: (0, 0)),                # gn1 beta
        pl.BlockSpec((Cout, K9), lambda n: (0, 0)),            # conv1 weight (bf16)
        pl.BlockSpec((Cout, 1), lambda n: (0, 0)),             # conv1 bias
        pl.BlockSpec((Cout, 1), lambda n: (0, 0)),             # gn2 gamma
        pl.BlockSpec((Cout, 1), lambda n: (0, 0)),             # gn2 beta
        pl.BlockSpec((Cout, 9 * Cout), lambda n: (0, 0)),      # conv2 weight (bf16)
        pl.BlockSpec((Cout, 1), lambda n: (0, 0)),             # conv2 bias
    ]
    out_spec = pl.BlockSpec((B_blk, Cout, HW), lambda n: (n, 0, 0))

    return pl.pallas_call(
        kernel,
        out_shape=jax.ShapeDtypeStruct((N, Cout, HW), jnp.float32),
        grid_spec=pltpu.PrefetchScalarGridSpec(
            num_scalar_prefetch=0,
            grid=(N // B_blk,),
            in_specs=in_specs,
            out_specs=out_spec,
            scratch_shapes=[
                pltpu.VMEM((C, PADW), jnp.bfloat16),           # flat padded image (bf16)
                pltpu.VMEM((K9, HW), jnp.bfloat16),            # 9-tap stack (im2col)
            ],
        ),
        compiler_params=pltpu.CompilerParams(
            dimension_semantics=("parallel",)),
    )


def resblock_forward(x_nchw, emb, params, num_groups, block_batch=None):
    """x_nchw: (N, C, H, W) f32 (torch layout), emb: (N, E) f32."""
    N, C, H, W = x_nchw.shape
    HW = H * W
    Cout = params["w1"].shape[0]

    if block_batch is None:
        # Largest small block that keeps the parallel grid length >= 2
        # (v7x has 2 TensorCores; length-1 grid idles one of them).
        block_batch = 1
        for cand in (4, 3, 2):
            if N % cand == 0 and N // cand >= 2:
                block_batch = cand
                break

    x3 = x_nchw.reshape(N, C, HW).astype(jnp.float32)       # free reshape, no transpose

    # emb_layers: SiLU -> Linear, batched once in XLA (negligible at small N,
    # avoids a serial 32-lane VPU/XLU pass per grid step at large N).
    e = emb.astype(jnp.float32)
    e = e * jax.nn.sigmoid(e)
    emb_out = e @ params["lw"].astype(jnp.float32).T + params["lb"].astype(jnp.float32)[None, :]
    emb_out3 = emb_out.reshape(N, Cout, 1)

    def conv_w(w):
        # torch (Cout, Cin, 3, 3) -> tap-major (Cout, 9*Cin) slab, bf16 for MXU
        co, ci = w.shape[0], w.shape[1]
        return jnp.transpose(w, (0, 2, 3, 1)).reshape(co, 9 * ci).astype(jnp.bfloat16)

    def col(v):
        return v.reshape(-1, 1).astype(jnp.float32)

    call = make_resblock_call(N, H, W, C, Cout, num_groups, block_batch)
    out3 = call(x3, emb_out3,
                col(params["gn1_g"]), col(params["gn1_b"]),
                conv_w(params["w1"]), col(params["b1"]),
                col(params["gn2_g"]), col(params["gn2_b"]),
                conv_w(params["w2"]), col(params["b2"]))
    return out3.reshape(N, Cout, H, W)


# ---------------- pure-JAX reference (for numerical check) ----------------
# The reference uses bf16 conv operands with f32 accumulation to match the
# kernel's MXU precision (deliberate precision/performance tradeoff; the 5e-3
# tolerance is load-bearing); everything else is f32.

def _ref_group_norm(x, gamma, beta, G):
    N, C, H, W = x.shape
    xr = x.reshape(N, G, C // G, H, W)
    mean = xr.mean(axis=(2, 3, 4), keepdims=True)
    var = ((xr - mean) ** 2).mean(axis=(2, 3, 4), keepdims=True)
    xn = ((xr - mean) / jnp.sqrt(var + EPS)).reshape(N, C, H, W)
    return xn * gamma.reshape(1, C, 1, 1) + beta.reshape(1, C, 1, 1)


def _ref_conv3x3(x, w, b):
    y = lax.conv_general_dilated(
        x.astype(jnp.bfloat16), w.astype(jnp.bfloat16), (1, 1), "SAME",
        dimension_numbers=("NCHW", "OIHW", "NCHW"),
        preferred_element_type=jnp.float32)
    return y + b.reshape(1, -1, 1, 1)


def ref_forward(x, emb, p, G):
    h = _ref_group_norm(x, p["gn1_g"], p["gn1_b"], G)
    h = h * jax.nn.sigmoid(h)
    h = _ref_conv3x3(h, p["w1"], p["b1"])
    e = emb * jax.nn.sigmoid(emb)
    eo = e @ p["lw"].T + p["lb"].reshape(1, -1)
    h = h + eo[:, :, None, None]
    h = _ref_group_norm(h, p["gn2_g"], p["gn2_b"], G)
    h = h * jax.nn.sigmoid(h)
    h = _ref_conv3x3(h, p["w2"], p["b2"])
    return x + h


# ---------------- main ----------------

if __name__ == "__main__":
    # normalization(channels) == GroupNorm(32, channels) -> channels must be a
    # multiple of 32; smallest valid config.
    N, C, H, W, E = 2, 32, 16, 16, 32
    G = 32

    key = jax.random.PRNGKey(0)
    ks = jax.random.split(key, 8)
    x = jax.random.normal(ks[0], (N, C, H, W), jnp.float32)
    emb = jax.random.normal(ks[1], (N, E), jnp.float32)

    params = {
        # GroupNorm affine params (torch default init: gamma=1, beta=0)
        "gn1_g": jnp.ones((C,), jnp.float32),
        "gn1_b": jnp.zeros((C,), jnp.float32),
        # Conv2d(C, C, 3, padding=1) in in_layers, torch OIHW layout
        "w1": 0.1 * jax.random.normal(ks[2], (C, C, 3, 3), jnp.float32),
        "b1": 0.1 * jax.random.normal(ks[3], (C,), jnp.float32),
        # Linear(E, C) in emb_layers (torch weight layout: (out, in))
        "lw": 0.1 * jax.random.normal(ks[4], (C, E), jnp.float32),
        "lb": 0.1 * jax.random.normal(ks[5], (C,), jnp.float32),
        "gn2_g": jnp.ones((C,), jnp.float32),
        "gn2_b": jnp.zeros((C,), jnp.float32),
        # zero_module() zero-initializes this conv in the PyTorch module;
        # deterministic nonzero values exercise the out-conv path here
        # (forward semantics are identical).
        "w2": 0.05 * jax.random.normal(ks[6], (C, C, 3, 3), jnp.float32),
        "b2": 0.05 * jax.random.normal(ks[7], (C,), jnp.float32),
    }

    out = resblock_forward(x, emb, params, num_groups=G)
    out = jax.block_until_ready(out)
    assert out.shape == (N, C, H, W)

    # Cross-check against the pure-JAX reference (bf16-matched conv operands).
    ref = ref_forward(x, emb, params, G)
    np.testing.assert_allclose(np.asarray(out), np.asarray(ref),
                               atol=5e-3, rtol=5e-3)

    print("KERNEL_OK")
</pallas_src>

<mosaic_0001>
module attributes {stable_mosaic.version = 11 : i64} {
  func.func @kernel(%arg0: i32, %arg1: memref<1x32x256xf32, #tpu.memory_space<vmem>>, %arg2: memref<1x32x1xf32, #tpu.memory_space<vmem>>, %arg3: memref<32x1xf32, #tpu.memory_space<vmem>>, %arg4: memref<32x1xf32, #tpu.memory_space<vmem>>, %arg5: memref<32x288xbf16, #tpu.memory_space<vmem>>, %arg6: memref<32x1xf32, #tpu.memory_space<vmem>>, %arg7: memref<32x1xf32, #tpu.memory_space<vmem>>, %arg8: memref<32x1xf32, #tpu.memory_space<vmem>>, %arg9: memref<32x288xbf16, #tpu.memory_space<vmem>>, %arg10: memref<32x1xf32, #tpu.memory_space<vmem>>, %arg11: memref<1x32x256xf32, #tpu.memory_space<vmem>>, %arg12: memref<32x512xbf16, #tpu.memory_space<vmem>>, %arg13: memref<288x256xbf16, #tpu.memory_space<vmem>>) attributes {dimension_semantics = [#tpu.dimension_semantics<parallel>], iteration_bounds = array<i64: 2>, scalar_prefetch = 0 : i64, scratch_operands = 2 : i64, tpu.core_type = #tpu.core_type<tc>, window_params = [{transform_indices = @transform_0, window_bounds = array<i64: 1, 32, 256>}, {transform_indices = @transform_1, window_bounds = array<i64: 1, 32, 1>}, {pipeline_mode = #tpu.pipeline_mode<synchronous>, transform_indices = @transform_2, window_bounds = array<i64: 32, 1>}, {pipeline_mode = #tpu.pipeline_mode<synchronous>, transform_indices = @transform_3, window_bounds = array<i64: 32, 1>}, {pipeline_mode = #tpu.pipeline_mode<synchronous>, transform_indices = @transform_4, window_bounds = array<i64: 32, 288>}, {pipeline_mode = #tpu.pipeline_mode<synchronous>, transform_indices = @transform_5, window_bounds = array<i64: 32, 1>}, {pipeline_mode = #tpu.pipeline_mode<synchronous>, transform_indices = @transform_6, window_bounds = array<i64: 32, 1>}, {pipeline_mode = #tpu.pipeline_mode<synchronous>, transform_indices = @transform_7, window_bounds = array<i64: 32, 1>}, {pipeline_mode = #tpu.pipeline_mode<synchronous>, transform_indices = @transform_8, window_bounds = array<i64: 32, 288>}, {pipeline_mode = #tpu.pipeline_mode<synchronous>, transform_indices = @transform_9, window_bounds = array<i64: 32, 1>}, {transform_indices = @transform_10, window_bounds = array<i64: 1, 32, 256>}]} {
    %0 = tpu.iota {dimensions = array<i32: 1>} : vector<1x256xi32>
    %c16_i32 = arith.constant 16 : i32
    %c0_i32 = arith.constant 0 : i32
    %1 = arith.cmpi eq, %c16_i32, %c0_i32 : i32
    %c1_i32 = arith.constant 1 : i32
    %2 = arith.select %1, %c1_i32, %c16_i32 : i32
    %3 = vector.broadcast %2 : i32 to vector<1x256xi32>
    %4 = arith.remsi %0, %3 : vector<1x256xi32>
    %c0_i32_0 = arith.constant 0 : i32
    %5 = vector.broadcast %c0_i32_0 : i32 to vector<1x256xi32>
    %6 = arith.cmpi ne, %4, %5 : vector<1x256xi32>
    %c0_i32_1 = arith.constant 0 : i32
    %7 = vector.broadcast %c0_i32_1 : i32 to vector<1x256xi32>
    %8 = arith.cmpi slt, %4, %7 : vector<1x256xi32>
    %c0_i32_2 = arith.constant 0 : i32
    %9 = arith.cmpi slt, %2, %c0_i32_2 : i32
    %10 = vector.broadcast %9 : i1 to vector<1x256xi1>
    %11 = vector.broadcast %10 : vector<1x256xi1> to vector<1x256xi1>
    %12 = arith.xori %8, %11 : vector<1x256xi1>
    %13 = arith.andi %12, %6 : vector<1x256xi1>
    %14 = vector.broadcast %2 : i32 to vector<1x256xi32>
    %15 = arith.addi %4, %14 : vector<1x256xi32>
    %16 = arith.select %13, %15, %4 : vector<1x256xi1>, vector<1x256xi32>
    %c1_i32_3 = arith.constant 1 : i32
    %17 = vector.broadcast %c1_i32_3 : i32 to vector<1x256xi32>
    %18 = arith.cmpi sge, %16, %17 : vector<1x256xi32>
    %c14_i32 = arith.constant 14 : i32
    %19 = vector.broadcast %c14_i32 : i32 to vector<1x256xi32>
    %20 = arith.cmpi sle, %16, %19 : vector<1x256xi32>
    %cst = arith.constant 0.000000e+00 : bf16
    %21 = vector.broadcast %cst : bf16 to vector<32x128xbf16>
    %c0 = arith.constant 0 : index
    %c0_4 = arith.constant 0 : index
    %22 = vector.load %arg12[%c0, %c0_4] : memref<32x512xbf16, #tpu.memory_space<vmem>>, vector<32x128xbf16>
    tpu.vector_store %arg12[%c0, %c0_4], %21 {strides = array<i32>} : memref<32x512xbf16, #tpu.memory_space<vmem>>, vector<32x128xbf16>,
    %cst_5 = arith.constant 0.000000e+00 : bf16
    %23 = vector.broadcast %cst_5 : bf16 to vector<32x128xbf16>
    %c0_6 = arith.constant 0 : index
    %c384 = arith.constant 384 : index
    %24 = vector.load %arg12[%c0_6, %c384] : memref<32x512xbf16, #tpu.memory_space<vmem>>, vector<32x128xbf16>
    tpu.vector_store %arg12[%c0_6, %c384], %23 {strides = array<i32>} : memref<32x512xbf16, #tpu.memory_space<vmem>>, vector<32x128xbf16>,
    %c0_7 = arith.constant 0 : index
    %c0_8 = arith.constant 0 : index
    %c0_9 = arith.constant 0 : index
    %25 = vector.load %arg1[%c0_7, %c0_8, %c0_9] : memref<1x32x256xf32, #tpu.memory_space<vmem>>, vector<1x32x256xf32>
    %26 = vector.shape_cast %25 : vector<1x32x256xf32> to vector<32x256xf32>
    %c0_10 = arith.constant 0 : index
    %c0_11 = arith.constant 0 : index
    %27 = vector.load %arg3[%c0_10, %c0_11] : memref<32x1xf32, #tpu.memory_space<vmem>>, vector<32x1xf32>
    %c0_12 = arith.constant 0 : index
    %c0_13 = arith.constant 0 : index
    %28 = vector.load %arg4[%c0_12, %c0_13] : memref<32x1xf32, #tpu.memory_space<vmem>>, vector<32x1xf32>
    %cst_14 = arith.constant dense<0.000000e+00> : vector<32xf32>
    %29 = vector.multi_reduction <add>, %26, %cst_14 [1] : vector<32x256xf32> to vector<32xf32>
    %30 = vector.shape_cast %29 : vector<32xf32> to vector<32x1xf32>
    %cst_15 = arith.constant 2.560000e+02 : f32
    %31 = vector.broadcast %cst_15 : f32 to vector<32x1xf32>
    %32 = arith.divf %30, %31 : vector<32x1xf32>
    %33 = vector.broadcast %32 : vector<32x1xf32> to vector<32x256xf32>
    %34 = arith.subf %26, %33 : vector<32x256xf32>
    %35 = arith.mulf %34, %34 : vector<32x256xf32>
    %cst_16 = arith.constant dense<0.000000e+00> : vector<32xf32>
    %36 = vector.multi_reduction <add>, %35, %cst_16 [1] : vector<32x256xf32> to vector<32xf32>
    %37 = vector.shape_cast %36 : vector<32xf32> to vector<32x1xf32>
    %cst_17 = arith.constant 2.560000e+02 : f32
    %38 = vector.broadcast %cst_17 : f32 to vector<32x1xf32>
    %39 = arith.divf %37, %38 : vector<32x1xf32>
    %cst_18 = arith.constant 9.99999974E-6 : f32
    %40 = vector.broadcast %cst_18 : f32 to vector<32x1xf32>
    %41 = arith.addf %39, %40 : vector<32x1xf32>
    %42 = math.rsqrt %41 : vector<32x1xf32>
    %43 = vector.broadcast %42 : vector<32x1xf32> to vector<32x256xf32>
    %44 = arith.mulf %34, %43 : vector<32x256xf32>
    %45 = vector.broadcast %27 : vector<32x1xf32> to vector<32x256xf32>
    %46 = arith.mulf %44, %45 : vector<32x256xf32>
    %47 = vector.broadcast %28 : vector<32x1xf32> to vector<32x256xf32>
    %48 = arith.addf %46, %47 : vector<32x256xf32>
    %49 = arith.negf %48 : vector<32x256xf32>
    %50 = math.exp %49 : vector<32x256xf32>
    %cst_19 = arith.constant 1.000000e+00 : f32
    %51 = vector.broadcast %cst_19 : f32 to vector<32x256xf32>
    %52 = arith.addf %51, %50 : vector<32x256xf32>
    %53 = arith.divf %51, %52 : vector<32x256xf32>
    %54 = arith.mulf %48, %53 : vector<32x256xf32>
    %55 = arith.truncf %54 : vector<32x256xf32> to vector<32x256xbf16>
    %c0_20 = arith.constant 0 : index
    %c128 = arith.constant 128 : index
    %56 = vector.load %arg12[%c0_20, %c128] : memref<32x512xbf16, #tpu.memory_space<vmem>>, vector<32x256xbf16>
    tpu.vector_store %arg12[%c0_20, %c128], %55 {strides = array<i32>} : memref<32x512xbf16, #tpu.memory_space<vmem>>, vector<32x256xbf16>,
    %c0_21 = arith.constant 0 : index
    %c111 = arith.constant 111 : index
    %57 = vector.load %arg12[%c0_21, %c111] : memref<32x512xbf16, #tpu.memory_space<vmem>>, vector<32x256xbf16>
    %cst_22 = arith.constant 0.000000e+00 : f32
    %58 = arith.truncf %cst_22 : f32 to bf16
    %59 = vector.shape_cast %18 : vector<1x256xi1> to vector<1x256xi1>
    %60 = vector.broadcast %59 : vector<1x256xi1> to vector<32x256xi1>
    %61 = vector.broadcast %58 : bf16 to vector<32x256xbf16>
    %62 = arith.select %60, %57, %61 : vector<32x256xi1>, vector<32x256xbf16>
    %c0_23 = arith.constant 0 : index
    %c0_24 = arith.constant 0 : index
    %63 = vector.load %arg13[%c0_23, %c0_24] : memref<288x256xbf16, #tpu.memory_space<vmem>>, vector<32x256xbf16>
    tpu.vector_store %arg13[%c0_23, %c0_24], %62 {strides = array<i32>} : memref<288x256xbf16, #tpu.memory_space<vmem>>, vector<32x256xbf16>,
    %c0_25 = arith.constant 0 : index
    %c112 = arith.constant 112 : index
    %64 = vector.load %arg12[%c0_25, %c112] : memref<32x512xbf16, #tpu.memory_space<vmem>>, vector<32x256xbf16>
    %c32 = arith.constant 32 : index
    %c0_26 = arith.constant 0 : index
    %65 = vector.load %arg13[%c32, %c0_26] : memref<288x256xbf16, #tpu.memory_space<vmem>>, vector<32x256xbf16>
    tpu.vector_store %arg13[%c32, %c0_26], %64 {strides = array<i32>} : memref<288x256xbf16, #tpu.memory_space<vmem>>, vector<32x256xbf16>,
    %c0_27 = arith.constant 0 : index
    %c113 = arith.constant 113 : index
    %66 = vector.load %arg12[%c0_27, %c113] : memref<32x512xbf16, #tpu.memory_space<vmem>>, vector<32x256xbf16>
    %cst_28 = arith.constant 0.000000e+00 : f32
    %67 = arith.truncf %cst_28 : f32 to bf16
    %68 = vector.shape_cast %20 : vector<1x256xi1> to vector<1x256xi1>
    %69 = vector.broadcast %68 : vector<1x256xi1> to vector<32x256xi1>
    %70 = vector.broadcast %67 : bf16 to vector<32x256xbf16>
    %71 = arith.select %69, %66, %70 : vector<32x256xi1>, vector<32x256xbf16>
    %c64 = arith.constant 64 : index
    %c0_29 = arith.constant 0 : index
    %72 = vector.load %arg13[%c64, %c0_29] : memref<288x256xbf16, #tpu.memory_space<vmem>>, vector<32x256xbf16>
    tpu.vector_store %arg13[%c64, %c0_29], %71 {strides = array<i32>} : memref<288x256xbf16, #tpu.memory_space<vmem>>, vector<32x256xbf16>,
    %c0_30 = arith.constant 0 : index
    %c127 = arith.constant 127 : index
    %73 = vector.load %arg12[%c0_30, %c127] : memref<32x512xbf16, #tpu.memory_space<vmem>>, vector<32x256xbf16>
    %cst_31 = arith.constant 0.000000e+00 : f32
    %74 = arith.truncf %cst_31 : f32 to bf16
    %75 = vector.shape_cast %18 : vector<1x256xi1> to vector<1x256xi1>
    %76 = vector.broadcast %75 : vector<1x256xi1> to vector<32x256xi1>
    %77 = vector.broadcast %74 : bf16 to vector<32x256xbf16>
    %78 = arith.select %76, %73, %77 : vector<32x256xi1>, vector<32x256xbf16>
    %c96 = arith.constant 96 : index
    %c0_32 = arith.constant 0 : index
    %79 = vector.load %arg13[%c96, %c0_32] : memref<288x256xbf16, #tpu.memory_space<vmem>>, vector<32x256xbf16>
    tpu.vector_store %arg13[%c96, %c0_32], %78 {strides = array<i32>} : memref<288x256xbf16, #tpu.memory_space<vmem>>, vector<32x256xbf16>,
    %c0_33 = arith.constant 0 : index
    %c128_34 = arith.constant 128 : index
    %80 = vector.load %arg12[%c0_33, %c128_34] : memref<32x512xbf16, #tpu.memory_space<vmem>>, vector<32x256xbf16>
    %c128_35 = arith.constant 128 : index
    %c0_36 = arith.constant 0 : index
    %81 = vector.load %arg13[%c128_35, %c0_36] : memref<288x256xbf16, #tpu.memory_space<vmem>>, vector<32x256xbf16>
    tpu.vector_store %arg13[%c128_35, %c0_36], %80 {strides = array<i32>} : memref<288x256xbf16, #tpu.memory_space<vmem>>, vector<32x256xbf16>,
    %c0_37 = arith.constant 0 : index
    %c129 = arith.constant 129 : index
    %82 = vector.load %arg12[%c0_37, %c129] : memref<32x512xbf16, #tpu.memory_space<vmem>>, vector<32x256xbf16>
    %cst_38 = arith.constant 0.000000e+00 : f32
    %83 = arith.truncf %cst_38 : f32 to bf16
    %84 = vector.shape_cast %20 : vector<1x256xi1> to vector<1x256xi1>
    %85 = vector.broadcast %84 : vector<1x256xi1> to vector<32x256xi1>
    %86 = vector.broadcast %83 : bf16 to vector<32x256xbf16>
    %87 = arith.select %85, %82, %86 : vector<32x256xi1>, vector<32x256xbf16>
    %c160 = arith.constant 160 : index
    %c0_39 = arith.constant 0 : index
    %88 = vector.load %arg13[%c160, %c0_39] : memref<288x256xbf16, #tpu.memory_space<vmem>>, vector<32x256xbf16>
    tpu.vector_store %arg13[%c160, %c0_39], %87 {strides = array<i32>} : memref<288x256xbf16, #tpu.memory_space<vmem>>, vector<32x256xbf16>,
    %c0_40 = arith.constant 0 : index
    %c143 = arith.constant 143 : index
    %89 = vector.load %arg12[%c0_40, %c143] : memref<32x512xbf16, #tpu.memory_space<vmem>>, vector<32x256xbf16>
    %cst_41 = arith.constant 0.000000e+00 : f32
    %90 = arith.truncf %cst_41 : f32 to bf16
    %91 = vector.shape_cast %18 : vector<1x256xi1> to vector<1x256xi1>
    %92 = vector.broadcast %91 : vector<1x256xi1> to vector<32x256xi1>
    %93 = vector.broadcast %90 : bf16 to vector<32x256xbf16>
    %94 = arith.select %92, %89, %93 : vector<32x256xi1>, vector<32x256xbf16>
    %c192 = arith.constant 192 : index
    %c0_42 = arith.constant 0 : index
    %95 = vector.load %arg13[%c192, %c0_42] : memref<288x256xbf16, #tpu.memory_space<vmem>>, vector<32x256xbf16>
    tpu.vector_store %arg13[%c192, %c0_42], %94 {strides = array<i32>} : memref<288x256xbf16, #tpu.memory_space<vmem>>, vector<32x256xbf16>,
    %c0_43 = arith.constant 0 : index
    %c144 = arith.constant 144 : index
    %96 = vector.load %arg12[%c0_43, %c144] : memref<32x512xbf16, #tpu.memory_space<vmem>>, vector<32x256xbf16>
    %c224 = arith.constant 224 : index
    %c0_44 = arith.constant 0 : index
    %97 = vector.load %arg13[%c224, %c0_44] : memref<288x256xbf16, #tpu.memory_space<vmem>>, vector<32x256xbf16>
    tpu.vector_store %arg13[%c224, %c0_44], %96 {strides = array<i32>} : memref<288x256xbf16, #tpu.memory_space<vmem>>, vector<32x256xbf16>,
    %c0_45 = arith.constant 0 : index
    %c145 = arith.constant 145 : index
    %98 = vector.load %arg12[%c0_45, %c145] : memref<32x512xbf16, #tpu.memory_space<vmem>>, vector<32x256xbf16>
    %cst_46 = arith.constant 0.000000e+00 : f32
    %99 = arith.truncf %cst_46 : f32 to bf16
    %100 = vector.shape_cast %20 : vector<1x256xi1> to vector<1x256xi1>
    %101 = vector.broadcast %100 : vector<1x256xi1> to vector<32x256xi1>
    %102 = vector.broadcast %99 : bf16 to vector<32x256xbf16>
    %103 = arith.select %101, %98, %102 : vector<32x256xi1>, vector<32x256xbf16>
    %c256 = arith.constant 256 : index
    %c0_47 = arith.constant 0 : index
    %104 = vector.load %arg13[%c256, %c0_47] : memref<288x256xbf16, #tpu.memory_space<vmem>>, vector<32x256xbf16>
    tpu.vector_store %arg13[%c256, %c0_47], %103 {strides = array<i32>} : memref<288x256xbf16, #tpu.memory_space<vmem>>, vector<32x256xbf16>,
    %c0_48 = arith.constant 0 : index
    %c0_49 = arith.constant 0 : index
    %105 = vector.load %arg5[%c0_48, %c0_49] : memref<32x288xbf16, #tpu.memory_space<vmem>>, vector<32x288xbf16>
    %c0_50 = arith.constant 0 : index
    %c0_51 = arith.constant 0 : index
    %106 = vector.load %arg13[%c0_50, %c0_51] : memref<288x256xbf16, #tpu.memory_space<vmem>>, vector<288x256xbf16>
    %cst_52 = arith.constant dense<0.000000e+00> : vector<32x256xf32>
    %107 = tpu.matmul %105, %106, %cst_52 {dimension_numbers = #tpu.dot_dimension_numbers<[1], [0], [0], [1], [0, 0, 1, 1], [], []>} : vector<32x288xbf16>, vector<288x256xbf16>, vector<32x256xf32> -> vector<32x256xf32>
    %c0_53 = arith.constant 0 : index
    %c0_54 = arith.constant 0 : index
    %108 = vector.load %arg6[%c0_53, %c0_54] : memref<32x1xf32, #tpu.memory_space<vmem>>, vector<32x1xf32>
    %109 = vector.broadcast %108 : vector<32x1xf32> to vector<32x256xf32>
    %110 = arith.addf %107, %109 : vector<32x256xf32>
    %c0_55 = arith.constant 0 : index
    %c0_56 = arith.constant 0 : index
    %c0_57 = arith.constant 0 : index
    %111 = vector.load %arg2[%c0_55, %c0_56, %c0_57] : memref<1x32x1xf32, #tpu.memory_space<vmem>>, vector<1x32x1xf32>
    %112 = vector.shape_cast %111 : vector<1x32x1xf32> to vector<32x1xf32>
    %113 = vector.broadcast %112 : vector<32x1xf32> to vector<32x256xf32>
    %114 = arith.addf %110, %113 : vector<32x256xf32>
    %c0_58 = arith.constant 0 : index
    %c0_59 = arith.constant 0 : index
    %115 = vector.load %arg7[%c0_58, %c0_59] : memref<32x1xf32, #tpu.memory_space<vmem>>, vector<32x1xf32>
    %c0_60 = arith.constant 0 : index
    %c0_61 = arith.constant 0 : index
    %116 = vector.load %arg8[%c0_60, %c0_61] : memref<32x1xf32, #tpu.memory_space<vmem>>, vector<32x1xf32>
    %cst_62 = arith.constant dense<0.000000e+00> : vector<32xf32>
    %117 = vector.multi_reduction <add>, %114, %cst_62 [1] : vector<32x256xf32> to vector<32xf32>
    %118 = vector.shape_cast %117 : vector<32xf32> to vector<32x1xf32>
    %cst_63 = arith.constant 2.560000e+02 : f32
    %119 = vector.broadcast %cst_63 : f32 to vector<32x1xf32>
    %120 = arith.divf %118, %119 : vector<32x1xf32>
    %121 = vector.broadcast %120 : vector<32x1xf32> to vector<32x256xf32>
    %122 = arith.subf %114, %121 : vector<32x256xf32>
    %123 = arith.mulf %122, %122 : vector<32x256xf32>
    %cst_64 = arith.constant dense<0.000000e+00> : vector<32xf32>
    %124 = vector.multi_reduction <add>, %123, %cst_64 [1] : vector<32x256xf32> to vector<32xf32>
    %125 = vector.shape_cast %124 : vector<32xf32> to vector<32x1xf32>
    %cst_65 = arith.constant 2.560000e+02 : f32
    %126 = vector.broadcast %cst_65 : f32 to vector<32x1xf32>
    %127 = arith.divf %125, %126 : vector<32x1xf32>
    %cst_66 = arith.constant 9.99999974E-6 : f32
    %128 = vector.broadcast %cst_66 : f32 to vector<32x1xf32>
    %129 = arith.addf %127, %128 : vector<32x1xf32>
    %130 = math.rsqrt %129 : vector<32x1xf32>
    %131 = vector.broadcast %130 : vector<32x1xf32> to vector<32x256xf32>
    %132 = arith.mulf %122, %131 : vector<32x256xf32>
    %133 = vector.broadcast %115 : vector<32x1xf32> to vector<32x256xf32>
    %134 = arith.mulf %132, %133 : vector<32x256xf32>
    %135 = vector.broadcast %116 : vector<32x1xf32> to vector<32x256xf32>
    %136 = arith.addf %134, %135 : vector<32x256xf32>
    %137 = arith.negf %136 : vector<32x256xf32>
    %138 = math.exp %137 : vector<32x256xf32>
    %cst_67 = arith.constant 1.000000e+00 : f32
    %139 = vector.broadcast %cst_67 : f32 to vector<32x256xf32>
    %140 = arith.addf %139, %138 : vector<32x256xf32>
    %141 = arith.divf %139, %140 : vector<32x256xf32>
    %142 = arith.mulf %136, %141 : vector<32x256xf32>
    %143 = arith.truncf %142 : vector<32x256xf32> to vector<32x256xbf16>
    %c0_68 = arith.constant 0 : index
    %c128_69 = arith.constant 128 : index
    %144 = vector.load %arg12[%c0_68, %c128_69] : memref<32x512xbf16, #tpu.memory_space<vmem>>, vector<32x256xbf16>
    tpu.vector_store %arg12[%c0_68, %c128_69], %143 {strides = array<i32>} : memref<32x512xbf16, #tpu.memory_space<vmem>>, vector<32x256xbf16>,
    %c0_70 = arith.constant 0 : index
    %c111_71 = arith.constant 111 : index
    %145 = vector.load %arg12[%c0_70, %c111_71] : memref<32x512xbf16, #tpu.memory_space<vmem>>, vector<32x256xbf16>
    %cst_72 = arith.constant 0.000000e+00 : f32
    %146 = arith.truncf %cst_72 : f32 to bf16
    %147 = vector.shape_cast %18 : vector<1x256xi1> to vector<1x256xi1>
    %148 = vector.broadcast %147 : vector<1x256xi1> to vector<32x256xi1>
    %149 = vector.broadcast %146 : bf16 to vector<32x256xbf16>
    %150 = arith.select %148, %145, %149 : vector<32x256xi1>, vector<32x256xbf16>
    %c0_73 = arith.constant 0 : index
    %c0_74 = arith.constant 0 : index
    %151 = vector.load %arg13[%c0_73, %c0_74] : memref<288x256xbf16, #tpu.memory_space<vmem>>, vector<32x256xbf16>
    tpu.vector_store %arg13[%c0_73, %c0_74], %150 {strides = array<i32>} : memref<288x256xbf16, #tpu.memory_space<vmem>>, vector<32x256xbf16>,
    %c0_75 = arith.constant 0 : index
    %c112_76 = arith.constant 112 : index
    %152 = vector.load %arg12[%c0_75, %c112_76] : memref<32x512xbf16, #tpu.memory_space<vmem>>, vector<32x256xbf16>
    %c32_77 = arith.constant 32 : index
    %c0_78 = arith.constant 0 : index
    %153 = vector.load %arg13[%c32_77, %c0_78] : memref<288x256xbf16, #tpu.memory_space<vmem>>, vector<32x256xbf16>
    tpu.vector_store %arg13[%c32_77, %c0_78], %152 {strides = array<i32>} : memref<288x256xbf16, #tpu.memory_space<vmem>>, vector<32x256xbf16>,
    %c0_79 = arith.constant 0 : index
    %c113_80 = arith.constant 113 : index
    %154 = vector.load %arg12[%c0_79, %c113_80] : memref<32x512xbf16, #tpu.memory_space<vmem>>, vector<32x256xbf16>
    %cst_81 = arith.constant 0.000000e+00 : f32
    %155 = arith.truncf %cst_81 : f32 to bf16
    %156 = vector.shape_cast %20 : vector<1x256xi1> to vector<1x256xi1>
    %157 = vector.broadcast %156 : vector<1x256xi1> to vector<32x256xi1>
    %158 = vector.broadcast %155 : bf16 to vector<32x256xbf16>
    %159 = arith.select %157, %154, %158 : vector<32x256xi1>, vector<32x256xbf16>
    %c64_82 = arith.constant 64 : index
    %c0_83 = arith.constant 0 : index
    %160 = vector.load %arg13[%c64_82, %c0_83] : memref<288x256xbf16, #tpu.memory_space<vmem>>, vector<32x256xbf16>
    tpu.vector_store %arg13[%c64_82, %c0_83], %159 {strides = array<i32>} : memref<288x256xbf16, #tpu.memory_space<vmem>>, vector<32x256xbf16>,
    %c0_84 = arith.constant 0 : index
    %c127_85 = arith.constant 127 : index
    %161 = vector.load %arg12[%c0_84, %c127_85] : memref<32x512xbf16, #tpu.memory_space<vmem>>, vector<32x256xbf16>
    %cst_86 = arith.constant 0.000000e+00 : f32
    %162 = arith.truncf %cst_86 : f32 to bf16
    %163 = vector.shape_cast %18 : vector<1x256xi1> to vector<1x256xi1>
    %164 = vector.broadcast %163 : vector<1x256xi1> to vector<32x256xi1>
    %165 = vector.broadcast %162 : bf16 to vector<32x256xbf16>
    %166 = arith.select %164, %161, %165 : vector<32x256xi1>, vector<32x256xbf16>
    %c96_87 = arith.constant 96 : index
    %c0_88 = arith.constant 0 : index
    %167 = vector.load %arg13[%c96_87, %c0_88] : memref<288x256xbf16, #tpu.memory_space<vmem>>, vector<32x256xbf16>
    tpu.vector_store %arg13[%c96_87, %c0_88], %166 {strides = array<i32>} : memref<288x256xbf16, #tpu.memory_space<vmem>>, vector<32x256xbf16>,
    %c0_89 = arith.constant 0 : index
    %c128_90 = arith.constant 128 : index
    %168 = vector.load %arg12[%c0_89, %c128_90] : memref<32x512xbf16, #tpu.memory_space<vmem>>, vector<32x256xbf16>
    %c128_91 = arith.constant 128 : index
    %c0_92 = arith.constant 0 : index
    %169 = vector.load %arg13[%c128_91, %c0_92] : memref<288x256xbf16, #tpu.memory_space<vmem>>, vector<32x256xbf16>
    tpu.vector_store %arg13[%c128_91, %c0_92], %168 {strides = array<i32>} : memref<288x256xbf16, #tpu.memory_space<vmem>>, vector<32x256xbf16>,
    %c0_93 = arith.constant 0 : index
    %c129_94 = arith.constant 129 : index
    %170 = vector.load %arg12[%c0_93, %c129_94] : memref<32x512xbf16, #tpu.memory_space<vmem>>, vector<32x256xbf16>
    %cst_95 = arith.constant 0.000000e+00 : f32
    %171 = arith.truncf %cst_95 : f32 to bf16
    %172 = vector.shape_cast %20 : vector<1x256xi1> to vector<1x256xi1>
    %173 = vector.broadcast %172 : vector<1x256xi1> to vector<32x256xi1>
    %174 = vector.broadcast %171 : bf16 to vector<32x256xbf16>
    %175 = arith.select %173, %170, %174 : vector<32x256xi1>, vector<32x256xbf16>
    %c160_96 = arith.constant 160 : index
    %c0_97 = arith.constant 0 : index
    %176 = vector.load %arg13[%c160_96, %c0_97] : memref<288x256xbf16, #tpu.memory_space<vmem>>, vector<32x256xbf16>
    tpu.vector_store %arg13[%c160_96, %c0_97], %175 {strides = array<i32>} : memref<288x256xbf16, #tpu.memory_space<vmem>>, vector<32x256xbf16>,
    %c0_98 = arith.constant 0 : index
    %c143_99 = arith.constant 143 : index
    %177 = vector.load %arg12[%c0_98, %c143_99] : memref<32x512xbf16, #tpu.memory_space<vmem>>, vector<32x256xbf16>
    %cst_100 = arith.constant 0.000000e+00 : f32
    %178 = arith.truncf %cst_100 : f32 to bf16
    %179 = vector.shape_cast %18 : vector<1x256xi1> to vector<1x256xi1>
    %180 = vector.broadcast %179 : vector<1x256xi1> to vector<32x256xi1>
    %181 = vector.broadcast %178 : bf16 to vector<32x256xbf16>
    %182 = arith.select %180, %177, %181 : vector<32x256xi1>, vector<32x256xbf16>
    %c192_101 = arith.constant 192 : index
    %c0_102 = arith.constant 0 : index
    %183 = vector.load %arg13[%c192_101, %c0_102] : memref<288x256xbf16, #tpu.memory_space<vmem>>, vector<32x256xbf16>
    tpu.vector_store %arg13[%c192_101, %c0_102], %182 {strides = array<i32>} : memref<288x256xbf16, #tpu.memory_space<vmem>>, vector<32x256xbf16>,
    %c0_103 = arith.constant 0 : index
    %c144_104 = arith.constant 144 : index
    %184 = vector.load %arg12[%c0_103, %c144_104] : memref<32x512xbf16, #tpu.memory_space<vmem>>, vector<32x256xbf16>
    %c224_105 = arith.constant 224 : index
    %c0_106 = arith.constant 0 : index
    %185 = vector.load %arg13[%c224_105, %c0_106] : memref<288x256xbf16, #tpu.memory_space<vmem>>, vector<32x256xbf16>
    tpu.vector_store %arg13[%c224_105, %c0_106], %184 {strides = array<i32>} : memref<288x256xbf16, #tpu.memory_space<vmem>>, vector<32x256xbf16>,
    %c0_107 = arith.constant 0 : index
    %c145_108 = arith.constant 145 : index
    %186 = vector.load %arg12[%c0_107, %c145_108] : memref<32x512xbf16, #tpu.memory_space<vmem>>, vector<32x256xbf16>
    %cst_109 = arith.constant 0.000000e+00 : f32
    %187 = arith.truncf %cst_109 : f32 to bf16
    %188 = vector.shape_cast %20 : vector<1x256xi1> to vector<1x256xi1>
    %189 = vector.broadcast %188 : vector<1x256xi1> to vector<32x256xi1>
    %190 = vector.broadcast %187 : bf16 to vector<32x256xbf16>
    %191 = arith.select %189, %186, %190 : vector<32x256xi1>, vector<32x256xbf16>
    %c256_110 = arith.constant 256 : index
    %c0_111 = arith.constant 0 : index
    %192 = vector.load %arg13[%c256_110, %c0_111] : memref<288x256xbf16, #tpu.memory_space<vmem>>, vector<32x256xbf16>
    tpu.vector_store %arg13[%c256_110, %c0_111], %191 {strides = array<i32>} : memref<288x256xbf16, #tpu.memory_space<vmem>>, vector<32x256xbf16>,
    %c0_112 = arith.constant 0 : index
    %c0_113 = arith.constant 0 : index
    %193 = vector.load %arg9[%c0_112, %c0_113] : memref<32x288xbf16, #tpu.memory_space<vmem>>, vector<32x288xbf16>
    %c0_114 = arith.constant 0 : index
    %c0_115 = arith.constant 0 : index
    %194 = vector.load %arg13[%c0_114, %c0_115] : memref<288x256xbf16, #tpu.memory_space<vmem>>, vector<288x256xbf16>
    %cst_116 = arith.constant dense<0.000000e+00> : vector<32x256xf32>
    %195 = tpu.matmul %193, %194, %cst_116 {dimension_numbers = #tpu.dot_dimension_numbers<[1], [0], [0], [1], [0, 0, 1, 1], [], []>} : vector<32x288xbf16>, vector<288x256xbf16>, vector<32x256xf32> -> vector<32x256xf32>
    %c0_117 = arith.constant 0 : index
    %c0_118 = arith.constant 0 : index
    %196 = vector.load %arg10[%c0_117, %c0_118] : memref<32x1xf32, #tpu.memory_space<vmem>>, vector<32x1xf32>
    %197 = vector.broadcast %196 : vector<32x1xf32> to vector<32x256xf32>
    %198 = arith.addf %195, %197 : vector<32x256xf32>
    %c0_119 = arith.constant 0 : index
    %c0_120 = arith.constant 0 : index
    %c0_121 = arith.constant 0 : index
    %199 = vector.load %arg1[%c0_119, %c0_120, %c0_121] : memref<1x32x256xf32, #tpu.memory_space<vmem>>, vector<1x32x256xf32>
    %200 = vector.shape_cast %199 : vector<1x32x256xf32> to vector<32x256xf32>
    %201 = arith.addf %200, %198 : vector<32x256xf32>
    %c0_122 = arith.constant 0 : index
    %c0_123 = arith.constant 0 : index
    %c0_124 = arith.constant 0 : index
    %202 = vector.load %arg11[%c0_122, %c0_123, %c0_124] : memref<1x32x256xf32, #tpu.memory_space<vmem>>, vector<1x32x256xf32>
    %203 = vector.shape_cast %202 : vector<1x32x256xf32> to vector<32x256xf32>
    %204 = vector.shape_cast %201 : vector<32x256xf32> to vector<1x32x256xf32>
    tpu.vector_store %arg11[%c0_122, %c0_123, %c0_124], %204 {strides = array<i32>} : memref<1x32x256xf32, #tpu.memory_space<vmem>>, vector<1x32x256xf32>,
    return
  }
  func.func @transform_0(%arg0: i32) -> (i32, i32, i32) {
    %c0_i32 = arith.constant 0 : i32
    %c0_i32_0 = arith.constant 0 : i32
    %c0_i32_1 = arith.constant 0 : i32
    return %arg0, %c0_i32, %c0_i32_0 : i32, i32, i32
  }
  func.func @transform_1(%arg0: i32) -> (i32, i32, i32) {
    %c0_i32 = arith.constant 0 : i32
    %c0_i32_0 = arith.constant 0 : i32
    %c0_i32_1 = arith.constant 0 : i32
    return %arg0, %c0_i32, %c0_i32_0 : i32, i32, i32
  }
  func.func @transform_2(%arg0: i32) -> (i32, i32) {
    %c0_i32 = arith.constant 0 : i32
    %c0_i32_0 = arith.constant 0 : i32
    %c0_i32_1 = arith.constant 0 : i32
    return %c0_i32, %c0_i32_0 : i32, i32
  }
  func.func @transform_3(%arg0: i32) -> (i32, i32) {
    %c0_i32 = arith.constant 0 : i32
    %c0_i32_0 = arith.constant 0 : i32
    %c0_i32_1 = arith.constant 0 : i32
    return %c0_i32, %c0_i32_0 : i32, i32
  }
  func.func @transform_4(%arg0: i32) -> (i32, i32) {
    %c0_i32 = arith.constant 0 : i32
    %c0_i32_0 = arith.constant 0 : i32
    %c0_i32_1 = arith.constant 0 : i32
    return %c0_i32, %c0_i32_0 : i32, i32
  }
  func.func @transform_5(%arg0: i32) -> (i32, i32) {
    %c0_i32 = arith.constant 0 : i32
    %c0_i32_0 = arith.constant 0 : i32
    %c0_i32_1 = arith.constant 0 : i32
    return %c0_i32, %c0_i32_0 : i32, i32
  }
  func.func @transform_6(%arg0: i32) -> (i32, i32) {
    %c0_i32 = arith.constant 0 : i32
    %c0_i32_0 = arith.constant 0 : i32
    %c0_i32_1 = arith.constant 0 : i32
    return %c0_i32, %c0_i32_0 : i32, i32
  }
  func.func @transform_7(%arg0: i32) -> (i32, i32) {
    %c0_i32 = arith.constant 0 : i32
    %c0_i32_0 = arith.constant 0 : i32
    %c0_i32_1 = arith.constant 0 : i32
    return %c0_i32, %c0_i32_0 : i32, i32
  }
  func.func @transform_8(%arg0: i32) -> (i32, i32) {
    %c0_i32 = arith.constant 0 : i32
    %c0_i32_0 = arith.constant 0 : i32
    %c0_i32_1 = arith.constant 0 : i32
    return %c0_i32, %c0_i32_0 : i32, i32
  }
  func.func @transform_9(%arg0: i32) -> (i32, i32) {
    %c0_i32 = arith.constant 0 : i32
    %c0_i32_0 = arith.constant 0 : i32
    %c0_i32_1 = arith.constant 0 : i32
    return %c0_i32, %c0_i32_0 : i32, i32
  }
  func.func @transform_10(%arg0: i32) -> (i32, i32, i32) {
    %c0_i32 = arith.constant 0 : i32
    %c0_i32_0 = arith.constant 0 : i32
    %c0_i32_1 = arith.constant 0 : i32
    return %arg0, %c0_i32, %c0_i32_0 : i32, i32, i32
  }
}

</mosaic_0001>

<llo_original>
// kernel: tpu_custom_call.1
$region0: #{tpu_custom_call.1}
  #allocation0 [shape = 'u32[]', space=smem, size = 0x4, offset = 0x4, fixed_abs, tag = 'smem constant byte address 0x4 - core index']
  #allocation1 [shape = 'u32[144,128]{1,0:T(1,128)}', space=vmem, size = 0x12000, scoped, tag = 'internal scratch']
  #allocation2 [shape = 'bf16[32,512]{1,0:T(8,128)(2,1)}', space=vmem, size = 0x8000, scoped, tag = 'scratch operand']
  #allocation3 [shape = 'bf16[288,256]{1,0:T(8,128)(2,1)}', space=vmem, size = 0x24000, scoped, tag = 'scratch operand']
  %s0 = inlined_call_operand.vmem [shape: f32[2,32,256], index: 0, kind: input, shape index: {}]
  %s1 = inlined_call_operand.vmem [shape: f32[2,32,1], index: 1, kind: input, shape index: {}]
  %s2 = inlined_call_operand.vmem [shape: f32[32,1], index: 2, kind: input, shape index: {}]
  %s3 = inlined_call_operand.vmem [shape: f32[32,1], index: 3, kind: input, shape index: {}]
  %s4 = inlined_call_operand.vmem [shape: bf16[32,288], index: 4, kind: input, shape index: {}]
  %s5 = inlined_call_operand.vmem [shape: f32[32,1], index: 5, kind: input, shape index: {}]
  %s6 = inlined_call_operand.vmem [shape: f32[32,1], index: 6, kind: input, shape index: {}]
  %s7 = inlined_call_operand.vmem [shape: f32[32,1], index: 7, kind: input, shape index: {}]
  %s8 = inlined_call_operand.vmem [shape: bf16[32,288], index: 8, kind: input, shape index: {}]
  %s9 = inlined_call_operand.vmem [shape: f32[32,1], index: 9, kind: input, shape index: {}]
  %s10 = inlined_call_operand.hbm [shape: f32[2,32,256], index: 10, kind: output, shape index: {}]
  %s11 = sld [smem:[#allocation0]]
  $region73: #{tpu_custom_call.1} parent=0
    _
  %s13 = ssub.s32 1, %s11
  %s14 = scalar_select 0, %s13, %s11
  $region1: #{tpu_custom_call.1} parent=0
    #allocation4 [shape = 'u8[65536]{0}', space=vmem, size = 0x10000, scoped, tag = 'output window, operand 0']
    #allocation5 [shape = 's32[2]{0}', space=sflag, size = 0x8, scoped, tag = 'scoped memory for tpu_custom_call.1']
    %15 = vsyncpa [#allocation5], 0
    %s16 = scalar_lea.sflag [#allocation5], 1
    %17 = vsyncpa %s16, 0
    loop: start=0, step=1, limit=4
    $region2: #{tpu_custom_call.1} parent=1 // loop_pre_header
      _
    $region3: #{tpu_custom_call.1} parent=1 // loop_header
      %s19 = sphi 0, %s23
      %p20 = scmp.ge.s32.totalorder %s19, 4
      %s29 = sphi 0, %s31
      %s32 = sphi 0, %s29
      %s33 = sphi 0, %s32
      %s49 = sphi 0, %s33
      %s55 = sphi 0, %s57
      %s58 = sphi 0, %s55
      %s59 = sphi 0, %s58
      %s75 = sphi 0, %s59
      %s79 = sphi 0, %s79
      %s81 = sphi 0, %s79
      %s82 = sphi 0, %s81
      %s96 = sphi 0, %s82
      %s100 = sphi 0, %s100
      %s102 = sphi 0, %s100
      %s103 = sphi 0, %s102
      %s117 = sphi 0, %s103
      %s121 = sphi 0, %s121
      %s123 = sphi 0, %s121
      %s124 = sphi 0, %s123
      %s138 = sphi 0, %s124
      %s142 = sphi 0, %s142
      %s144 = sphi 0, %s142
      %s145 = sphi 0, %s144
      %s159 = sphi 0, %s145
      %s163 = sphi 0, %s163
      %s165 = sphi 0, %s163
      %s166 = sphi 0, %s165
      %s180 = sphi 0, %s166
      %s184 = sphi 0, %s184
      %s186 = sphi 0, %s184
      %s187 = sphi 0, %s186
      %s201 = sphi 0, %s187
      %s205 = sphi 0, %s205
      %s207 = sphi 0, %s205
      %s208 = sphi 0, %s207
      %s222 = sphi 0, %s208
      %s226 = sphi 0, %s226
      %s228 = sphi 0, %s226
      %s229 = sphi 0, %s228
      %s243 = sphi 0, %s229
      %s249 = sphi 0, %s251
      %s252 = sphi 0, %s249
      %s253 = sphi 0, %s252
      %s269 = sphi 0, %s253
    $region4: #{tpu_custom_call.1} parent=1 // loop_header_branch
      %22 = sbr.rel (%p20) target = $region8
    $region5: #{tpu_custom_call.1} parent=1 // loop_body
      %s24 = ssub.s32 %s19, 1
      %s25 = ssub.s32 %s19, 2
      %s26 = sadd.s32 %s19, 1
      %s27 = ssub.s32 %s19, %s26
      %p28 = scmp.eq.s32.totalorder %s27, 0
      %s30 = sadd.s32 %s29, 1
      %s31 = scalar_select %p28, %s29, %s30
      %p34 = pneg %p28
      %p35 = scmp.eq.s32.totalorder %s19, 1
      %p36 = por %p34, %p35
      %p37 = scmp.ne.s32.totalorder %s29, %s32
      %p38 = scmp.eq.s32.totalorder %s19, 0
      %p39 = por %p37, %p38
      %p40 = scmp.ne.s32.totalorder %s29, %s32
      %p41 = scmp.eq.s32.totalorder %s24, 1
      %p42 = por %p40, %p41
      %p43 = scmp.ne.s32.totalorder %s32, %s33
      %p44 = scmp.eq.s32.totalorder %s24, 0
      %p45 = por %p43, %p44
      %p46 = scmp.ne.s32.totalorder %s32, %s33
      %p47 = scmp.eq.s32.totalorder %s25, 1
      %p48 = por %p46, %p47
      %p50 = scmp.ne.s32.totalorder %s33, %s49
      %p51 = scmp.eq.s32.totalorder %s25, 0
      %p52 = por %p50, %p51
      %s53 = ssub.s32 %s19, %s26
      %p54 = scmp.eq.s32.totalorder %s53, 0
      %s56 = sadd.s32 %s55, 1
      %s57 = scalar_select %p54, %s55, %s56
      %p60 = pneg %p54
      %p61 = scmp.eq.s32.totalorder %s19, 1
      %p62 = por %p60, %p61
      %p63 = scmp.ne.s32.totalorder %s55, %s58
      %p64 = scmp.eq.s32.totalorder %s19, 0
      %p65 = por %p63, %p64
      %p66 = scmp.ne.s32.totalorder %s55, %s58
      %p67 = scmp.eq.s32.totalorder %s24, 1
      %p68 = por %p66, %p67
      %p69 = scmp.ne.s32.totalorder %s58, %s59
      %p70 = scmp.eq.s32.totalorder %s24, 0
      %p71 = por %p69, %p70
      %p72 = scmp.ne.s32.totalorder %s58, %s59
      %p73 = scmp.eq.s32.totalorder %s25, 1
      %p74 = por %p72, %p73
      %p76 = scmp.ne.s32.totalorder %s59, %s75
      %p77 = scmp.eq.s32.totalorder %s25, 0
      %p78 = por %p76, %p77
      %s80 = sadd.s32 %s79, 1
      %p83 = scmp.eq.s32.totalorder %s19, 1
      %p84 = scmp.ne.s32.totalorder %s79, %s81
      %p85 = scmp.eq.s32.totalorder %s19, 0
      %p86 = por %p84, %p85
      %p87 = scmp.ne.s32.totalorder %s79, %s81
      %p88 = scmp.eq.s32.totalorder %s24, 1
      %p89 = por %p87, %p88
      %p90 = scmp.ne.s32.totalorder %s81, %s82
      %p91 = scmp.eq.s32.totalorder %s24, 0
      %p92 = por %p90, %p91
      %p93 = scmp.ne.s32.totalorder %s81, %s82
      %p94 = scmp.eq.s32.totalorder %s25, 1
      %p95 = por %p93, %p94
      %p97 = scmp.ne.s32.totalorder %s82, %s96
      %p98 = scmp.eq.s32.totalorder %s25, 0
      %p99 = por %p97, %p98
      %s101 = sadd.s32 %s100, 1
      %p104 = scmp.eq.s32.totalorder %s19, 1
      %p105 = scmp.ne.s32.totalorder %s100, %s102
      %p106 = scmp.eq.s32.totalorder %s19, 0
      %p107 = por %p105, %p106
      %p108 = scmp.ne.s32.totalorder %s100, %s102
      %p109 = scmp.eq.s32.totalorder %s24, 1
      %p110 = por %p108, %p109
      %p111 = scmp.ne.s32.totalorder %s102, %s103
      %p112 = scmp.eq.s32.totalorder %s24, 0
      %p113 = por %p111, %p112
      %p114 = scmp.ne.s32.totalorder %s102, %s103
      %p115 = scmp.eq.s32.totalorder %s25, 1
      %p116 = por %p114, %p115
      %p118 = scmp.ne.s32.totalorder %s103, %s117
      %p119 = scmp.eq.s32.totalorder %s25, 0
      %p120 = por %p118, %p119
      %s122 = sadd.s32 %s121, 1
      %p125 = scmp.eq.s32.totalorder %s19, 1
      %p126 = scmp.ne.s32.totalorder %s121, %s123
      %p127 = scmp.eq.s32.totalorder %s19, 0
      %p128 = por %p126, %p127
      %p129 = scmp.ne.s32.totalorder %s121, %s123
      %p130 = scmp.eq.s32.totalorder %s24, 1
      %p131 = por %p129, %p130
      %p132 = scmp.ne.s32.totalorder %s123, %s124
      %p133 = scmp.eq.s32.totalorder %s24, 0
      %p134 = por %p132, %p133
      %p135 = scmp.ne.s32.totalorder %s123, %s124
      %p136 = scmp.eq.s32.totalorder %s25, 1
      %p137 = por %p135, %p136
      %p139 = scmp.ne.s32.totalorder %s124, %s138
      %p140 = scmp.eq.s32.totalorder %s25, 0
      %p141 = por %p139, %p140
      %s143 = sadd.s32 %s142, 1
      %p146 = scmp.eq.s32.totalorder %s19, 1
      %p147 = scmp.ne.s32.totalorder %s142, %s144
      %p148 = scmp.eq.s32.totalorder %s19, 0
      %p149 = por %p147, %p148
      %p150 = scmp.ne.s32.totalorder %s142, %s144
      %p151 = scmp.eq.s32.totalorder %s24, 1
      %p152 = por %p150, %p151
      %p153 = scmp.ne.s32.totalorder %s144, %s145
      %p154 = scmp.eq.s32.totalorder %s24, 0
      %p155 = por %p153, %p154
      %p156 = scmp.ne.s32.totalorder %s144, %s145
      %p157 = scmp.eq.s32.totalorder %s25, 1
      %p158 = por %p156, %p157
      %p160 = scmp.ne.s32.totalorder %s145, %s159
      %p161 = scmp.eq.s32.totalorder %s25, 0
      %p162 = por %p160, %p161
      %s164 = sadd.s32 %s163, 1
      %p167 = scmp.eq.s32.totalorder %s19, 1
      %p168 = scmp.ne.s32.totalorder %s163, %s165
      %p169 = scmp.eq.s32.totalorder %s19, 0
      %p170 = por %p168, %p169
      %p171 = scmp.ne.s32.totalorder %s163, %s165
      %p172 = scmp.eq.s32.totalorder %s24, 1
      %p173 = por %p171, %p172
      %p174 = scmp.ne.s32.totalorder %s165, %s166
      %p175 = scmp.eq.s32.totalorder %s24, 0
      %p176 = por %p174, %p175
      %p177 = scmp.ne.s32.totalorder %s165, %s166
      %p178 = scmp.eq.s32.totalorder %s25, 1
      %p179 = por %p177, %p178
      %p181 = scmp.ne.s32.totalorder %s166, %s180
      %p182 = scmp.eq.s32.totalorder %s25, 0
      %p183 = por %p181, %p182
      %s185 = sadd.s32 %s184, 1
      %p188 = scmp.eq.s32.totalorder %s19, 1
      %p189 = scmp.ne.s32.totalorder %s184, %s186
      %p190 = scmp.eq.s32.totalorder %s19, 0
      %p191 = por %p189, %p190
      %p192 = scmp.ne.s32.totalorder %s184, %s186
      %p193 = scmp.eq.s32.totalorder %s24, 1
      %p194 = por %p192, %p193
      %p195 = scmp.ne.s32.totalorder %s186, %s187
      %p196 = scmp.eq.s32.totalorder %s24, 0
      %p197 = por %p195, %p196
      %p198 = scmp.ne.s32.totalorder %s186, %s187
      %p199 = scmp.eq.s32.totalorder %s25, 1
      %p200 = por %p198, %p199
      %p202 = scmp.ne.s32.totalorder %s187, %s201
      %p203 = scmp.eq.s32.totalorder %s25, 0
      %p204 = por %p202, %p203
      %s206 = sadd.s32 %s205, 1
      %p209 = scmp.eq.s32.totalorder %s19, 1
      %p210 = scmp.ne.s32.totalorder %s205, %s207
      %p211 = scmp.eq.s32.totalorder %s19, 0
      %p212 = por %p210, %p211
      %p213 = scmp.ne.s32.totalorder %s205, %s207
      %p214 = scmp.eq.s32.totalorder %s24, 1
      %p215 = por %p213, %p214
      %p216 = scmp.ne.s32.totalorder %s207, %s208
      %p217 = scmp.eq.s32.totalorder %s24, 0
      %p218 = por %p216, %p217
      %p219 = scmp.ne.s32.totalorder %s207, %s208
      %p220 = scmp.eq.s32.totalorder %s25, 1
      %p221 = por %p219, %p220
      %p223 = scmp.ne.s32.totalorder %s208, %s222
      %p224 = scmp.eq.s32.totalorder %s25, 0
      %p225 = por %p223, %p224
      %s227 = sadd.s32 %s226, 1
      %p230 = scmp.eq.s32.totalorder %s19, 1
      %p231 = scmp.ne.s32.totalorder %s226, %s228
      %p232 = scmp.eq.s32.totalorder %s19, 0
      %p233 = por %p231, %p232
      %p234 = scmp.ne.s32.totalorder %s226, %s228
      %p235 = scmp.eq.s32.totalorder %s24, 1
      %p236 = por %p234, %p235
      %p237 = scmp.ne.s32.totalorder %s228, %s229
      %p238 = scmp.eq.s32.totalorder %s24, 0
      %p239 = por %p237, %p238
      %p240 = scmp.ne.s32.totalorder %s228, %s229
      %p241 = scmp.eq.s32.totalorder %s25, 1
      %p242 = por %p240, %p241
      %p244 = scmp.ne.s32.totalorder %s229, %s243
      %p245 = scmp.eq.s32.totalorder %s25, 0
      %p246 = por %p244, %p245
      %s247 = ssub.s32 %s19, %s26
      %p248 = scmp.eq.s32.totalorder %s247, 0
      %s250 = sadd.s32 %s249, 1
      %s251 = scalar_select %p248, %s249, %s250
      %p254 = pneg %p248
      %p255 = scmp.eq.s32.totalorder %s19, 1
      %p256 = por %p254, %p255
      %p257 = scmp.ne.s32.totalorder %s249, %s252
      %p258 = scmp.eq.s32.totalorder %s19, 0
      %p259 = por %p257, %p258
      %p260 = scmp.ne.s32.totalorder %s249, %s252
      %p261 = scmp.eq.s32.totalorder %s24, 1
      %p262 = por %p260, %p261
      %p263 = scmp.ne.s32.totalorder %s252, %s253
      %p264 = scmp.eq.s32.totalorder %s24, 0
      %p265 = por %p263, %p264
      %p266 = scmp.ne.s32.totalorder %s252, %s253
      %p267 = scmp.eq.s32.totalorder %s25, 1
      %p268 = por %p266, %p267
      %p270 = scmp.ne.s32.totalorder %s253, %s269
      %p271 = scmp.eq.s32.totalorder %s25, 0
      %p272 = por %p270, %p271
      %p273 = scmp.le.s32.totalorder 1, %s19
      %p274 = scmp.lt.s32.totalorder %s19, 3
      %p275 = pnand %p273, %p274
      %p276 = pneg %p275
      // Predicated region
      $region9: #{tpu_custom_call.1} parent=5 // pred_check
        _
      $region10: #{tpu_custom_call.1} parent=5 // pred_check_branch
        %278 = sbr.rel (%p275) target = $region12
      $region11: #{tpu_custom_call.1} parent=5 // pred_region
        %s279 = ssub.s32 %s19, 1
        // Predicated region
        $region13: #{tpu_custom_call.1} parent=11 // pred_check
          %p280 = pneg %p92
        $region14: #{tpu_custom_call.1} parent=11 // pred_check_branch
          %282 = sbr.rel (%p280) target = $region16
        $region15: #{tpu_custom_call.1} parent=11 // pred_region
          _
        $region16: #{tpu_custom_call.1} parent=11 // pred_fallthru
          _
        // Predicated region
        $region17: #{tpu_custom_call.1} parent=11 // pred_check
          %p283 = pneg %p113
        $region18: #{tpu_custom_call.1} parent=11 // pred_check_branch
          %285 = sbr.rel (%p283) target = $region20
        $region19: #{tpu_custom_call.1} parent=11 // pred_region
          _
        $region20: #{tpu_custom_call.1} parent=11 // pred_fallthru
          _
        // Predicated region
        $region21: #{tpu_custom_call.1} parent=11 // pred_check
          %p286 = pneg %p134
        $region22: #{tpu_custom_call.1} parent=11 // pred_check_branch
          %288 = sbr.rel (%p286) target = $region24
        $region23: #{tpu_custom_call.1} parent=11 // pred_region
          _
        $region24: #{tpu_custom_call.1} parent=11 // pred_fallthru
          _
        // Predicated region
        $region25: #{tpu_custom_call.1} parent=11 // pred_check
          %p289 = pneg %p155
        $region26: #{tpu_custom_call.1} parent=11 // pred_check_branch
          %291 = sbr.rel (%p289) target = $region28
        $region27: #{tpu_custom_call.1} parent=11 // pred_region
          _
        $region28: #{tpu_custom_call.1} parent=11 // pred_fallthru
          _
        // Predicated region
        $region29: #{tpu_custom_call.1} parent=11 // pred_check
          %p292 = pneg %p176
        $region30: #{tpu_custom_call.1} parent=11 // pred_check_branch
          %294 = sbr.rel (%p292) target = $region32
        $region31: #{tpu_custom_call.1} parent=11 // pred_region
          _
        $region32: #{tpu_custom_call.1} parent=11 // pred_fallthru
          _
        // Predicated region
        $region33: #{tpu_custom_call.1} parent=11 // pred_check
          %p295 = pneg %p197
        $region34: #{tpu_custom_call.1} parent=11 // pred_check_branch
          %297 = sbr.rel (%p295) target = $region36
        $region35: #{tpu_custom_call.1} parent=11 // pred_region
          _
        $region36: #{tpu_custom_call.1} parent=11 // pred_fallthru
          _
        // Predicated region
        $region37: #{tpu_custom_call.1} parent=11 // pred_check
          %p298 = pneg %p218
        $region38: #{tpu_custom_call.1} parent=11 // pred_check_branch
          %300 = sbr.rel (%p298) target = $region40
        $region39: #{tpu_custom_call.1} parent=11 // pred_region
          _
        $region40: #{tpu_custom_call.1} parent=11 // pred_fallthru
          _
        // Predicated region
        $region41: #{tpu_custom_call.1} parent=11 // pred_check
          %p301 = pneg %p239
        $region42: #{tpu_custom_call.1} parent=11 // pred_check_branch
          %303 = sbr.rel (%p301) target = $region44
        $region43: #{tpu_custom_call.1} parent=11 // pred_region
          _
        $region44: #{tpu_custom_call.1} parent=11 // pred_fallthru
          _
      $region12: #{tpu_custom_call.1} parent=5 // pred_fallthru
        _
      %p304 = scmp.lt.s32.totalorder %s19, 2
      // Predicated region
      $region45: #{tpu_custom_call.1} parent=5 // pred_check
        %p305 = pneg %p304
      $region46: #{tpu_custom_call.1} parent=5 // pred_check_branch
        %307 = sbr.rel (%p305) target = $region48
      $region47: #{tpu_custom_call.1} parent=5 // pred_region
        // Predicated region
        $region49: #{tpu_custom_call.1} parent=47 // pred_check
          %p308 = pneg %p39
        $region50: #{tpu_custom_call.1} parent=47 // pred_check_branch
          %310 = sbr.rel (%p308) target = $region52
        $region51: #{tpu_custom_call.1} parent=47 // pred_region
          %p311 = scmp.lt.s32.totalorder %s19, 1
          %s312 = scalar_select %p311, %s19, 1
          %s313 = smul.addr %s312, 8
          %s314 = smul.addr %s313, 8
          %s315 = scalar_lea.vmem %s0, %s314
        $region52: #{tpu_custom_call.1} parent=47 // pred_fallthru
          _
        // Predicated region
        $region53: #{tpu_custom_call.1} parent=47 // pred_check
          %p316 = pneg %p65
        $region54: #{tpu_custom_call.1} parent=47 // pred_check_branch
          %318 = sbr.rel (%p316) target = $region56
        $region55: #{tpu_custom_call.1} parent=47 // pred_region
          %p319 = scmp.lt.s32.totalorder %s19, 1
          %s320 = scalar_select %p319, %s19, 1
          %s321 = smul.addr %s320, 4
          %s322 = smul.addr %s321, 8
          %s323 = scalar_lea.vmem %s1, %s322
        $region56: #{tpu_custom_call.1} parent=47 // pred_fallthru
          _
      $region48: #{tpu_custom_call.1} parent=5 // pred_fallthru
        _
      %p324 = scmp.le.s32.totalorder 1, %s19
      %p325 = scmp.lt.s32.totalorder %s19, 3
      %p326 = pnand %p324, %p325
      %p327 = pneg %p326
      // Predicated region
      $region57: #{tpu_custom_call.1} parent=5 // pred_check
        _
      $region58: #{tpu_custom_call.1} parent=5 // pred_check_branch
        %329 = sbr.rel (%p326) target = $region60
      $region59: #{tpu_custom_call.1} parent=5 // pred_region
        %s330 = ssub.s32 %s19, 1
        %p331 = scmp.lt.s32.totalorder %s24, 1
        %s332 = scalar_select %p331, %s24, 1
        %s333 = smul.addr %s332, 8
        %s334 = smul.addr %s333, 8
        %s335 = scalar_lea.vmem %s0, %s334
        %p336 = pneg %p45
        %p337 = pneg %p42
        %p338 = scmp.lt.s32.totalorder %s24, 1
        %s339 = scalar_select %p338, %s24, 1
        %s340 = smul.addr %s339, 4
        %s341 = smul.addr %s340, 8
        %s342 = scalar_lea.vmem %s1, %s341
        %p343 = pneg %p71
        %p344 = pneg %p68
        %p345 = pneg %p92
        %p346 = pneg %p89
        %p347 = pneg %p113
        %p348 = pneg %p110
        %p349 = pneg %p134
        %p350 = pneg %p131
        %p351 = pneg %p155
        %p352 = pneg %p152
        %p353 = pneg %p176
        %p354 = pneg %p173
        %p355 = pneg %p197
        %p356 = pneg %p194
        %p357 = pneg %p218
        %p358 = pneg %p215
        %p359 = pneg %p239
        %p360 = pneg %p236
        %p361 = pneg %p265
        %p362 = pneg %p262
        %s363 = sand.u32 %s252, 1
        %s364 = scalar_lea.sflag [#allocation5], %s363
        %s365 = sand.u32 %s252, 1
        %s366 = smul.addr %s365, 64
        %s367 = scalar_lea.vmem [#allocation4], %s366
        %p368 = scmp.lt.s32.totalorder %s24, 1
        %s369 = scalar_select %p368, %s24, 1
        %s370 = smul.addr %s369, 8
        %s371 = smul.addr %s370, 8
        %s372 = scalar_lea.vmem %s0, %s371
        %p373 = scmp.lt.s32.totalorder %s24, 1
        %s374 = scalar_select %p373, %s24, 1
        %s375 = smul.addr %s374, 4
        %s376 = smul.addr %s375, 8
        %s377 = scalar_lea.vmem %s1, %s376
        %v381 = vlaneseq
        %v382 = vand.u32 %v381, 127
        %v383 = vadd.s32 %v382, 128
        %vm384 = vcmp.lt.s32.totalorder %v382, 0
        %v385 = vsub.s32 0, %v382
        %v386 = vsel %vm384, %v385, %v382
        %v387 = vshrl.u32 %v386, 4
        %v388 = vand.u32 %v386, 15
        %v389 = vsub.s32 0, %v388
        %v390 = vsel %vm384, %v389, %v388
        %vm391 = vcmp.lt.s32.totalorder %v383, 0
        %v392 = vsub.s32 0, %v383
        %v393 = vsel %vm391, %v392, %v383
        %v394 = vshrl.u32 %v393, 4
        %v395 = vand.u32 %v393, 15
        %v396 = vsub.s32 0, %v395
        %v397 = vsel %vm391, %v396, %v395
        %vm398 = vcmp.ne.s32.totalorder %v390, 0
        %vm399 = vcmp.ne.s32.totalorder %v397, 0
        %vm400 = vcmp.lt.s32.totalorder %v390, 0
        %vm401 = vcmp.lt.s32.totalorder %v397, 0
        %vm402 = vmand %vm400, %vm398
        %vm403 = vmand %vm401, %vm399
        %v404 = vadd.s32 %v390, 16
        %v405 = vadd.s32 %v397, 16
        %v406 = vsel %vm402, %v404, %v390
        %v407 = vsel %vm403, %v405, %v397
        %vm408 = vcmp.ge.s32.totalorder %v406, 1
        %vm409 = vcmp.ge.s32.totalorder %v407, 1
        %vm410 = vcmp.le.s32.totalorder %v406, 14
        %vm411 = vcmp.le.s32.totalorder %v407, 14
        %412 = vst [vmem:[#allocation2] sm:$0xf] 0
        %413 = vst [vmem:[#allocation2 + $0x10] sm:$0xf] 0
        %414 = vst [vmem:[#allocation2 + $0x20] sm:$0xf] 0
        %415 = vst [vmem:[#allocation2 + $0x30] sm:$0xf] 0
        %416 = vst [vmem:[#allocation2 + $0xc] sm:$0xf] 0
        %417 = vst [vmem:[#allocation2 + $0x1c] sm:$0xf] 0
        %418 = vst [vmem:[#allocation2 + $0x2c] sm:$0xf] 0
        %419 = vst [vmem:[#allocation2 + $0x3c] sm:$0xf] 0
        %v420 = vld [vmem:[%s372] sm:$0xff]
        %v421 = vld [vmem:[%s372 + $0x8] sm:$0xff]
        %v422 = vld [vmem:[%s372 + $0x10] sm:$0xff]
        %v423 = vld [vmem:[%s372 + $0x18] sm:$0xff]
        %v424 = vld [vmem:[%s372 + $0x20] sm:$0xff]
        %v425 = vld [vmem:[%s372 + $0x28] sm:$0xff]
        %v426 = vld [vmem:[%s372 + $0x30] sm:$0xff]
        %v427 = vld [vmem:[%s372 + $0x38] sm:$0xff]
        %v428 = vld [vmem:[%s2] sm:$0xff]
        %v429 = vld [vmem:[%s2 + $0x8] sm:$0xff]
        %v430 = vld [vmem:[%s2 + $0x10] sm:$0xff]
        %v431 = vld [vmem:[%s2 + $0x18] sm:$0xff]
        %v432 = vld [vmem:[%s3] sm:$0xff]
        %v433 = vld [vmem:[%s3 + $0x8] sm:$0xff]
        %v434 = vld [vmem:[%s3 + $0x10] sm:$0xff]
        %v435 = vld [vmem:[%s3 + $0x18] sm:$0xff]
        %v436 = vadd.f32 %v420, %v421
        %437 = vadd.xlane.f32.xlu0 %v436
        %v438 = vpop.xlane.xlu0 %437
        %v439 = vadd.f32 %v422, %v423
        %440 = vadd.xlane.f32.xlu0 %v439
        %v441 = vpop.xlane.xlu0 %440
        %v442 = vadd.f32 %v424, %v425
        %443 = vadd.xlane.f32.xlu0 %v442
        %v444 = vpop.xlane.xlu0 %443
        %v445 = vadd.f32 %v426, %v427
        %446 = vadd.xlane.f32.xlu0 %v445
        %v447 = vpop.xlane.xlu0 %446
        %v448 = vrcp.pop 256.0
        %v449 = vmul.f32 %v438, %v448
        %v450 = vmul.f32 %v441, %v448
        %v451 = vmul.f32 %v444, %v448
        %v452 = vmul.f32 %v447, %v448
        %v453 = vsub.f32 %v420, %v449
        %v454 = vsub.f32 %v421, %v449
        %v455 = vsub.f32 %v422, %v450
        %v456 = vsub.f32 %v423, %v450
        %v457 = vsub.f32 %v424, %v451
        %v458 = vsub.f32 %v425, %v451
        %v459 = vsub.f32 %v426, %v452
        %v460 = vsub.f32 %v427, %v452
        %v461 = vmul.f32 %v453, %v453
        %v462 = vmul.f32 %v454, %v454
        %v463 = vmul.f32 %v455, %v455
        %v464 = vmul.f32 %v456, %v456
        %v465 = vmul.f32 %v457, %v457
        %v466 = vmul.f32 %v458, %v458
        %v467 = vmul.f32 %v459, %v459
        %v468 = vmul.f32 %v460, %v460
        %v469 = vadd.f32 %v461, %v462
        %470 = vadd.xlane.f32.xlu0 %v469
        %v471 = vpop.xlane.xlu0 %470
        %v472 = vadd.f32 %v463, %v464
        %473 = vadd.xlane.f32.xlu0 %v472
        %v474 = vpop.xlane.xlu0 %473
        %v475 = vadd.f32 %v465, %v466
        %476 = vadd.xlane.f32.xlu0 %v475
        %v477 = vpop.xlane.xlu0 %476
        %v478 = vadd.f32 %v467, %v468
        %479 = vadd.xlane.f32.xlu0 %v478
        %v480 = vpop.xlane.xlu0 %479
        %v481 = vmul.f32 %v471, %v448
        %v482 = vmul.f32 %v474, %v448
        %v483 = vmul.f32 %v477, %v448
        %v484 = vmul.f32 %v480, %v448
        %v485 = vadd.f32 %v481, 1e-05
        %v486 = vadd.f32 %v482, 1e-05
        %v487 = vadd.f32 %v483, 1e-05
        %v488 = vadd.f32 %v484, 1e-05
        %v489 = vrsqrt.pop %v485
        %v490 = vrsqrt.pop %v486
        %v491 = vrsqrt.pop %v487
        %v492 = vrsqrt.pop %v488
        %v493 = vmul.f32 %v453, %v489
        %v494 = vmul.f32 %v454, %v489
        %v495 = vmul.f32 %v455, %v490
        %v496 = vmul.f32 %v456, %v490
        %v497 = vmul.f32 %v457, %v491
        %v498 = vmul.f32 %v458, %v491
        %v499 = vmul.f32 %v459, %v492
        %v500 = vmul.f32 %v460, %v492
        %502 = vset.pattern.permute.xlu0 0
        %503 = vperm.xlu0 %502, %v428
        %v504 = vpop.permute.xlu0 %503
        %507 = vset.pattern.permute.xlu0 0
        %508 = vperm.xlu0 %507, %v429
        %v509 = vpop.permute.xlu0 %508
        %512 = vset.pattern.permute.xlu0 0
        %513 = vperm.xlu0 %512, %v430
        %v514 = vpop.permute.xlu0 %513
        %517 = vset.pattern.permute.xlu0 0
        %518 = vperm.xlu0 %517, %v431
        %v519 = vpop.permute.xlu0 %518
        %v521 = vmul.f32 %v493, %v504
        %v522 = vmul.f32 %v494, %v504
        %v523 = vmul.f32 %v495, %v509
        %v524 = vmul.f32 %v496, %v509
        %v525 = vmul.f32 %v497, %v514
        %v526 = vmul.f32 %v498, %v514
        %v527 = vmul.f32 %v499, %v519
        %v528 = vmul.f32 %v500, %v519
        %530 = vset.pattern.permute.xlu0 0
        %531 = vperm.xlu0 %530, %v432
        %v532 = vpop.permute.xlu0 %531
        %535 = vset.pattern.permute.xlu0 0
        %536 = vperm.xlu0 %535, %v433
        %v537 = vpop.permute.xlu0 %536
        %540 = vset.pattern.permute.xlu0 0
        %541 = vperm.xlu0 %540, %v434
        %v542 = vpop.permute.xlu0 %541
        %545 = vset.pattern.permute.xlu0 0
        %546 = vperm.xlu0 %545, %v435
        %v547 = vpop.permute.xlu0 %546
        %v549 = vadd.f32 %v521, %v532
        %v550 = vadd.f32 %v522, %v532
        %v551 = vadd.f32 %v523, %v537
        %v552 = vadd.f32 %v524, %v537
        %v553 = vadd.f32 %v525, %v542
        %v554 = vadd.f32 %v526, %v542
        %v555 = vadd.f32 %v527, %v547
        %v556 = vadd.f32 %v528, %v547
        %v557 = vxor.u32 %v549, 2147483648
        %v558 = vxor.u32 %v550, 2147483648
        %v559 = vxor.u32 %v551, 2147483648
        %v560 = vxor.u32 %v552, 2147483648
        %v561 = vxor.u32 %v553, 2147483648
        %v562 = vxor.u32 %v554, 2147483648
        %v563 = vxor.u32 %v555, 2147483648
        %v564 = vxor.u32 %v556, 2147483648
        %v565 = vmul.f32 %v557, 1.442695
        %v566 = vpow.pop %v565
        %v567 = vmul.f32 %v558, 1.442695
        %v568 = vpow.pop %v567
        %v569 = vmul.f32 %v559, 1.442695
        %v570 = vpow.pop %v569
        %v571 = vmul.f32 %v560, 1.442695
        %v572 = vpow.pop %v571
        %v573 = vmul.f32 %v561, 1.442695
        %v574 = vpow.pop %v573
        %v575 = vmul.f32 %v562, 1.442695
        %v576 = vpow.pop %v575
        %v577 = vmul.f32 %v563, 1.442695
        %v578 = vpow.pop %v577
        %v579 = vmul.f32 %v564, 1.442695
        %v580 = vpow.pop %v579
        %v581 = vadd.f32 %v566, 1.0
        %v582 = vadd.f32 %v568, 1.0
        %v583 = vadd.f32 %v570, 1.0
        %v584 = vadd.f32 %v572, 1.0
        %v585 = vadd.f32 %v574, 1.0
        %v586 = vadd.f32 %v576, 1.0
        %v587 = vadd.f32 %v578, 1.0
        %v588 = vadd.f32 %v580, 1.0
        %v589 = vrcp.pop %v581
        %v590 = vmul.f32 1.0, %v589
        %v591 = vrcp.pop %v582
        %v592 = vmul.f32 1.0, %v591
        %v593 = vrcp.pop %v583
        %v594 = vmul.f32 1.0, %v593
        %v595 = vrcp.pop %v584
        %v596 = vmul.f32 1.0, %v595
        %v597 = vrcp.pop %v585
        %v598 = vmul.f32 1.0, %v597
        %v599 = vrcp.pop %v586
        %v600 = vmul.f32 1.0, %v599
        %v601 = vrcp.pop %v587
        %v602 = vmul.f32 1.0, %v601
        %v603 = vrcp.pop %v588
        %v604 = vmul.f32 1.0, %v603
        %v605 = vmul.f32 %v549, %v590
        %v606 = vmul.f32 %v550, %v592
        %v607 = vmul.f32 %v551, %v594
        %v608 = vmul.f32 %v552, %v596
        %v609 = vmul.f32 %v553, %v598
        %v610 = vmul.f32 %v554, %v600
        %v611 = vmul.f32 %v555, %v602
        %v612 = vmul.f32 %v556, %v604
        %v613 = vpack.c.bf16 %v607, %v605
        %v614 = vpack.c.bf16 %v608, %v606
        %v615 = vpack.c.bf16 %v611, %v609
        %v616 = vpack.c.bf16 %v612, %v610
        %v621 = vunpack.c.l.b16 %v613
        %v622 = vunpack.c.l.b16 %v614
        %v623 = vunpack.c.h.b16 %v613
        %v624 = vunpack.c.h.b16 %v614
        %v625 = vunpack.c.l.b16 %v615
        %v626 = vunpack.c.l.b16 %v616
        %v627 = vunpack.c.h.b16 %v615
        %v628 = vunpack.c.h.b16 %v616
        %v629 = vpack.c.b16 %v622, %v621
        %v630 = vpack.c.b16 %v624, %v623
        %v631 = vpack.c.b16 %v626, %v625
        %v632 = vpack.c.b16 %v628, %v627
        %637 = vst [vmem:[#allocation2 + $0x4] sm:$0xff] %v629
        %638 = vst [vmem:[#allocation2 + $0x14] sm:$0xff] %v630
        %639 = vst [vmem:[#allocation2 + $0x24] sm:$0xff] %v631
        %640 = vst [vmem:[#allocation2 + $0x34] sm:$0xff] %v632
        %v641 = vld [vmem:[#allocation2] sm:$0xff]
        %v642 = vld [vmem:[#allocation2 + $0x8] sm:$0xf]
        %v643 = vld [vmem:[#allocation2 + $0x10] sm:$0xff]
        %v644 = vld [vmem:[#allocation2 + $0x18] sm:$0xf]
        %v645 = vld [vmem:[#allocation2 + $0x20] sm:$0xff]
        %v646 = vld [vmem:[#allocation2 + $0x28] sm:$0xf]
        %v647 = vld [vmem:[#allocation2 + $0x30] sm:$0xff]
        %v648 = vld [vmem:[#allocation2 + $0x38] sm:$0xf]
        %v649 = vsel %vm408, 1, 0
        %v650 = vsel %vm409, 1, 0
        %vm651 = vcmp.eq.s32.totalorder %v649, 1
        %vm652 = vcmp.eq.s32.totalorder %v650, 1
        %vm653 = vmpackc.low %vm652, %vm651
        %v654 = vsel %vm653, 65537, 0
        %655 = vrot.lane.b32.xlu0 %v654, 111
        %v656 = vpop.permute.xlu0 %655
        %v657 = vrot.slane %v656, 4
        %vm658 = vcmask 908288
        %v659 = vsel %vm658, %v657, %v656
        %vm660 = vcmp.ne.s16.totalorder %v659, 0
        %vm661 = vcmp.ne.s16.totalorder %v657, 0
        %v662 = vsel %vm660, %v641, 0
        %v663 = vsel %vm661, %v642, 0
        %v664 = vsel %vm660, %v643, 0
        %v665 = vsel %vm661, %v644, 0
        %v666 = vsel %vm660, %v645, 0
        %v667 = vsel %vm661, %v646, 0
        %v668 = vsel %vm660, %v647, 0
        %v669 = vsel %vm661, %v648, 0
        %678 = vrot.lane.b32.xlu0 %v662, 17
        %v679 = vpop.permute.xlu0 %678
        %680 = vrot.lane.b32.xlu0 %v663, 17
        %v681 = vpop.permute.xlu0 %680
        %682 = vrot.lane.b32.xlu0 %v664, 17
        %v683 = vpop.permute.xlu0 %682
        %684 = vrot.lane.b32.xlu0 %v665, 17
        %v685 = vpop.permute.xlu0 %684
        %686 = vrot.lane.b32.xlu0 %v666, 17
        %v687 = vpop.permute.xlu0 %686
        %688 = vrot.lane.b32.xlu0 %v667, 17
        %v689 = vpop.permute.xlu0 %688
        %690 = vrot.lane.b32.xlu0 %v668, 17
        %v691 = vpop.permute.xlu0 %690
        %692 = vrot.lane.b32.xlu0 %v669, 17
        %v693 = vpop.permute.xlu0 %692
        %v694 = vrot.slane %v679, 4
        %v695 = vrot.slane %v681, 4
        %v696 = vrot.slane %v683, 4
        %v697 = vrot.slane %v685, 4
        %v698 = vrot.slane %v687, 4
        %v699 = vrot.slane %v689, 4
        %v700 = vrot.slane %v691, 4
        %v701 = vrot.slane %v693, 4
        %vm702 = vcmask 1043456
        %v703 = vsel %vm702, %v694, %v695
        %vm704 = vcmask 138240
        %v705 = vsel %vm704, %v679, %v703
        %v706 = vsel %vm702, %v696, %v697
        %v707 = vsel %vm704, %v683, %v706
        %v708 = vsel %vm702, %v698, %v699
        %v709 = vsel %vm704, %v687, %v708
        %v710 = vsel %vm702, %v700, %v701
        %v711 = vsel %vm704, %v691, %v710
        %716 = vst [vmem:[#allocation3] sm:$0xff] %v705
        %717 = vst [vmem:[#allocation3 + $0x8] sm:$0xff] %v707
        %718 = vst [vmem:[#allocation3 + $0x10] sm:$0xff] %v709
        %719 = vst [vmem:[#allocation3 + $0x18] sm:$0xff] %v711
        %v720 = vld [vmem:[#allocation2] sm:$0xff]
        %v721 = vld [vmem:[#allocation2 + $0x8] sm:$0xf]
        %v722 = vld [vmem:[#allocation2 + $0x10] sm:$0xff]
        %v723 = vld [vmem:[#allocation2 + $0x18] sm:$0xf]
        %v724 = vld [vmem:[#allocation2 + $0x20] sm:$0xff]
        %v725 = vld [vmem:[#allocation2 + $0x28] sm:$0xf]
        %v726 = vld [vmem:[#allocation2 + $0x30] sm:$0xff]
        %v727 = vld [vmem:[#allocation2 + $0x38] sm:$0xf]
        %736 = vrot.lane.b32.xlu0 %v720, 16
        %v737 = vpop.permute.xlu0 %736
        %738 = vrot.lane.b32.xlu0 %v721, 16
        %v739 = vpop.permute.xlu0 %738
        %740 = vrot.lane.b32.xlu0 %v722, 16
        %v741 = vpop.permute.xlu0 %740
        %742 = vrot.lane.b32.xlu0 %v723, 16
        %v743 = vpop.permute.xlu0 %742
        %744 = vrot.lane.b32.xlu0 %v724, 16
        %v745 = vpop.permute.xlu0 %744
        %746 = vrot.lane.b32.xlu0 %v725, 16
        %v747 = vpop.permute.xlu0 %746
        %748 = vrot.lane.b32.xlu0 %v726, 16
        %v749 = vpop.permute.xlu0 %748
        %750 = vrot.lane.b32.xlu0 %v727, 16
        %v751 = vpop.permute.xlu0 %750
        %v752 = vrot.slane %v737, 4
        %v753 = vrot.slane %v739, 4
        %v754 = vrot.slane %v741, 4
        %v755 = vrot.slane %v743, 4
        %v756 = vrot.slane %v745, 4
        %v757 = vrot.slane %v747, 4
        %v758 = vrot.slane %v749, 4
        %v759 = vrot.slane %v751, 4
        %v760 = vsel %vm702, %v752, %v753
        %vm761 = vcmask 130048
        %v762 = vsel %vm761, %v737, %v760
        %v763 = vsel %vm702, %v754, %v755
        %v764 = vsel %vm761, %v741, %v763
        %v765 = vsel %vm702, %v756, %v757
        %v766 = vsel %vm761, %v745, %v765
        %v767 = vsel %vm702, %v758, %v759
        %v768 = vsel %vm761, %v749, %v767
        %773 = vst [vmem:[#allocation3 + $0x20] sm:$0xff] %v762
        %774 = vst [vmem:[#allocation3 + $0x28] sm:$0xff] %v764
        %775 = vst [vmem:[#allocation3 + $0x30] sm:$0xff] %v766
        %776 = vst [vmem:[#allocation3 + $0x38] sm:$0xff] %v768
        %v777 = vld [vmem:[#allocation2] sm:$0xff]
        %v778 = vld [vmem:[#allocation2 + $0x8] sm:$0xf]
        %v779 = vld [vmem:[#allocation2 + $0x10] sm:$0xff]
        %v780 = vld [vmem:[#allocation2 + $0x18] sm:$0xf]
        %v781 = vld [vmem:[#allocation2 + $0x20] sm:$0xff]
        %v782 = vld [vmem:[#allocation2 + $0x28] sm:$0xf]
        %v783 = vld [vmem:[#allocation2 + $0x30] sm:$0xff]
        %v784 = vld [vmem:[#allocation2 + $0x38] sm:$0xf]
        %v785 = vsel %vm410, 1, 0
        %v786 = vsel %vm411, 1, 0
        %vm787 = vcmp.eq.s32.totalorder %v785, 1
        %vm788 = vcmp.eq.s32.totalorder %v786, 1
        %vm789 = vmpackc.low %vm788, %vm787
        %v790 = vsel %vm789, 65537, 0
        %791 = vrot.lane.b32.xlu0 %v790, 113
        %v792 = vpop.permute.xlu0 %791
        %v793 = vrot.slane %v792, 4
        %vm794 = vcmask 924672
        %v795 = vsel %vm794, %v793, %v792
        %vm796 = vcmp.ne.s16.totalorder %v795, 0
        %vm797 = vcmp.ne.s16.totalorder %v793, 0
        %v798 = vsel %vm796, %v777, 0
        %v799 = vsel %vm797, %v778, 0
        %v800 = vsel %vm796, %v779, 0
        %v801 = vsel %vm797, %v780, 0
        %v802 = vsel %vm796, %v781, 0
        %v803 = vsel %vm797, %v782, 0
        %v804 = vsel %vm796, %v783, 0
        %v805 = vsel %vm797, %v784, 0
        %814 = vrot.lane.b32.xlu0 %v798, 15
        %v815 = vpop.permute.xlu0 %814
        %816 = vrot.lane.b32.xlu0 %v799, 15
        %v817 = vpop.permute.xlu0 %816
        %818 = vrot.lane.b32.xlu0 %v800, 15
        %v819 = vpop.permute.xlu0 %818
        %820 = vrot.lane.b32.xlu0 %v801, 15
        %v821 = vpop.permute.xlu0 %820
        %822 = vrot.lane.b32.xlu0 %v802, 15
        %v823 = vpop.permute.xlu0 %822
        %824 = vrot.lane.b32.xlu0 %v803, 15
        %v825 = vpop.permute.xlu0 %824
        %826 = vrot.lane.b32.xlu0 %v804, 15
        %v827 = vpop.permute.xlu0 %826
        %828 = vrot.lane.b32.xlu0 %v805, 15
        %v829 = vpop.permute.xlu0 %828
        %v830 = vrot.slane %v815, 4
        %v831 = vrot.slane %v817, 4
        %v832 = vrot.slane %v819, 4
        %v833 = vrot.slane %v821, 4
        %v834 = vrot.slane %v823, 4
        %v835 = vrot.slane %v825, 4
        %v836 = vrot.slane %v827, 4
        %v837 = vrot.slane %v829, 4
        %v838 = vsel %vm702, %v830, %v831
        %vm839 = vcmask 121856
        %v840 = vsel %vm839, %v815, %v838
        %v841 = vsel %vm702, %v832, %v833
        %v842 = vsel %vm839, %v819, %v841
        %v843 = vsel %vm702, %v834, %v835
        %v844 = vsel %vm839, %v823, %v843
        %v845 = vsel %vm702, %v836, %v837
        %v846 = vsel %vm839, %v827, %v845
        %851 = vst [vmem:[#allocation3 + $0x40] sm:$0xff] %v840
        %852 = vst [vmem:[#allocation3 + $0x48] sm:$0xff] %v842
        %853 = vst [vmem:[#allocation3 + $0x50] sm:$0xff] %v844
        %854 = vst [vmem:[#allocation3 + $0x58] sm:$0xff] %v846
        %v855 = vld [vmem:[#allocation2] sm:$0xff]
        %v856 = vld [vmem:[#allocation2 + $0x8] sm:$0xf]
        %v857 = vld [vmem:[#allocation2 + $0x10] sm:$0xff]
        %v858 = vld [vmem:[#allocation2 + $0x18] sm:$0xf]
        %v859 = vld [vmem:[#allocation2 + $0x20] sm:$0xff]
        %v860 = vld [vmem:[#allocation2 + $0x28] sm:$0xf]
        %v861 = vld [vmem:[#allocation2 + $0x30] sm:$0xff]
        %v862 = vld [vmem:[#allocation2 + $0x38] sm:$0xf]
        %863 = vrot.lane.b32.xlu0 %v654, 127
        %v864 = vpop.permute.xlu0 %863
        %v865 = vrot.slane %v864, 4
        %vm866 = vcmask 1039360
        %v867 = vsel %vm866, %v865, %v864
        %vm868 = vcmp.ne.s16.totalorder %v867, 0
        %vm869 = vcmp.ne.s16.totalorder %v865, 0
        %v870 = vsel %vm868, %v855, 0
        %v871 = vsel %vm869, %v856, 0
        %v872 = vsel %vm868, %v857, 0
        %v873 = vsel %vm869, %v858, 0
        %v874 = vsel %vm868, %v859, 0
        %v875 = vsel %vm869, %v860, 0
        %v876 = vsel %vm868, %v861, 0
        %v877 = vsel %vm869, %v862, 0
        %886 = vrot.lane.b32.xlu0 %v870, 1
        %v887 = vpop.permute.xlu0 %886
        %888 = vrot.lane.b32.xlu0 %v871, 1
        %v889 = vpop.permute.xlu0 %888
        %890 = vrot.lane.b32.xlu0 %v872, 1
        %v891 = vpop.permute.xlu0 %890
        %892 = vrot.lane.b32.xlu0 %v873, 1
        %v893 = vpop.permute.xlu0 %892
        %894 = vrot.lane.b32.xlu0 %v874, 1
        %v895 = vpop.permute.xlu0 %894
        %896 = vrot.lane.b32.xlu0 %v875, 1
        %v897 = vpop.permute.xlu0 %896
        %898 = vrot.lane.b32.xlu0 %v876, 1
        %v899 = vpop.permute.xlu0 %898
        %900 = vrot.lane.b32.xlu0 %v877, 1
        %v901 = vpop.permute.xlu0 %900
        %v902 = vrot.slane %v887, 4
        %v903 = vrot.slane %v889, 4
        %v904 = vrot.slane %v891, 4
        %v905 = vrot.slane %v893, 4
        %v906 = vrot.slane %v895, 4
        %v907 = vrot.slane %v897, 4
        %v908 = vrot.slane %v899, 4
        %v909 = vrot.slane %v901, 4
        %v910 = vsel %vm702, %v902, %v903
        %vm911 = vcmask 7168
        %v912 = vsel %vm911, %v887, %v910
        %v913 = vsel %vm702, %v904, %v905
        %v914 = vsel %vm911, %v891, %v913
        %v915 = vsel %vm702, %v906, %v907
        %v916 = vsel %vm911, %v895, %v915
        %v917 = vsel %vm702, %v908, %v909
        %v918 = vsel %vm911, %v899, %v917
        %923 = vst [vmem:[#allocation3 + $0x60] sm:$0xff] %v912
        %924 = vst [vmem:[#allocation3 + $0x68] sm:$0xff] %v914
        %925 = vst [vmem:[#allocation3 + $0x70] sm:$0xff] %v916
        %926 = vst [vmem:[#allocation3 + $0x78] sm:$0xff] %v918
        %v927 = vld [vmem:[#allocation2 + $0x4] sm:$0xff]
        %v928 = vld [vmem:[#allocation2 + $0x14] sm:$0xff]
        %v929 = vld [vmem:[#allocation2 + $0x24] sm:$0xff]
        %v930 = vld [vmem:[#allocation2 + $0x34] sm:$0xff]
        %931 = vst [vmem:[#allocation3 + $0x80] sm:$0xff] %v927
        %932 = vst [vmem:[#allocation3 + $0x88] sm:$0xff] %v928
        %933 = vst [vmem:[#allocation3 + $0x90] sm:$0xff] %v929
        %934 = vst [vmem:[#allocation3 + $0x98] sm:$0xff] %v930
        %v935 = vld [vmem:[#allocation2 + $0x4] sm:$0xff]
        %v936 = vld [vmem:[#allocation2 + $0xc] sm:$0xf]
        %v937 = vld [vmem:[#allocation2 + $0x14] sm:$0xff]
        %v938 = vld [vmem:[#allocation2 + $0x1c] sm:$0xf]
        %v939 = vld [vmem:[#allocation2 + $0x24] sm:$0xff]
        %v940 = vld [vmem:[#allocation2 + $0x2c] sm:$0xf]
        %v941 = vld [vmem:[#allocation2 + $0x34] sm:$0xff]
        %v942 = vld [vmem:[#allocation2 + $0x3c] sm:$0xf]
        %943 = vrot.lane.b32.xlu0 %v790, 1
        %v944 = vpop.permute.xlu0 %943
        %v945 = vrot.slane %v944, 4
        %v946 = vsel %vm911, %v945, %v944
        %vm947 = vcmp.ne.s16.totalorder %v946, 0
        %vm948 = vcmp.ne.s16.totalorder %v945, 0
        %v949 = vsel %vm947, %v935, 0
        %v950 = vsel %vm948, %v936, 0
        %v951 = vsel %vm947, %v937, 0
        %v952 = vsel %vm948, %v938, 0
        %v953 = vsel %vm947, %v939, 0
        %v954 = vsel %vm948, %v940, 0
        %v955 = vsel %vm947, %v941, 0
        %v956 = vsel %vm948, %v942, 0
        %965 = vrot.lane.b32.xlu0 %v949, 127
        %v966 = vpop.permute.xlu0 %965
        %967 = vrot.lane.b32.xlu0 %v950, 127
        %v968 = vpop.permute.xlu0 %967
        %969 = vrot.lane.b32.xlu0 %v951, 127
        %v970 = vpop.permute.xlu0 %969
        %971 = vrot.lane.b32.xlu0 %v952, 127
        %v972 = vpop.permute.xlu0 %971
        %973 = vrot.lane.b32.xlu0 %v953, 127
        %v974 = vpop.permute.xlu0 %973
        %975 = vrot.lane.b32.xlu0 %v954, 127
        %v976 = vpop.permute.xlu0 %975
        %977 = vrot.lane.b32.xlu0 %v955, 127
        %v978 = vpop.permute.xlu0 %977
        %979 = vrot.lane.b32.xlu0 %v956, 127
        %v980 = vpop.permute.xlu0 %979
        %v981 = vrot.slane %v966, 4
        %v982 = vrot.slane %v968, 4
        %v983 = vrot.slane %v970, 4
        %v984 = vrot.slane %v972, 4
        %v985 = vrot.slane %v974, 4
        %v986 = vrot.slane %v976, 4
        %v987 = vrot.slane %v978, 4
        %v988 = vrot.slane %v980, 4
        %v989 = vsel %vm702, %v981, %v982
        %v990 = vsel %vm866, %v966, %v989
        %v991 = vsel %vm702, %v983, %v984
        %v992 = vsel %vm866, %v970, %v991
        %v993 = vsel %vm702, %v985, %v986
        %v994 = vsel %vm866, %v974, %v993
        %v995 = vsel %vm702, %v987, %v988
        %v996 = vsel %vm866, %v978, %v995
        %1001 = vst [vmem:[#allocation3 + $0xa0] sm:$0xff] %v990
        %1002 = vst [vmem:[#allocation3 + $0xa8] sm:$0xff] %v992
        %1003 = vst [vmem:[#allocation3 + $0xb0] sm:$0xff] %v994
        %1004 = vst [vmem:[#allocation3 + $0xb8] sm:$0xff] %v996
        %v1005 = vld [vmem:[#allocation2 + $0x4] sm:$0xff]
        %v1006 = vld [vmem:[#allocation2 + $0xc] sm:$0xf]
        %v1007 = vld [vmem:[#allocation2 + $0x14] sm:$0xff]
        %v1008 = vld [vmem:[#allocation2 + $0x1c] sm:$0xf]
        %v1009 = vld [vmem:[#allocation2 + $0x24] sm:$0xff]
        %v1010 = vld [vmem:[#allocation2 + $0x2c] sm:$0xf]
        %v1011 = vld [vmem:[#allocation2 + $0x34] sm:$0xff]
        %v1012 = vld [vmem:[#allocation2 + $0x3c] sm:$0xf]
        %1013 = vrot.lane.b32.xlu0 %v654, 15
        %v1014 = vpop.permute.xlu0 %1013
        %v1015 = vrot.slane %v1014, 4
        %v1016 = vsel %vm839, %v1015, %v1014
        %vm1017 = vcmp.ne.s16.totalorder %v1016, 0
        %vm1018 = vcmp.ne.s16.totalorder %v1015, 0
        %v1019 = vsel %vm1017, %v1005, 0
        %v1020 = vsel %vm1018, %v1006, 0
        %v1021 = vsel %vm1017, %v1007, 0
        %v1022 = vsel %vm1018, %v1008, 0
        %v1023 = vsel %vm1017, %v1009, 0
        %v1024 = vsel %vm1018, %v1010, 0
        %v1025 = vsel %vm1017, %v1011, 0
        %v1026 = vsel %vm1018, %v1012, 0
        %1035 = vrot.lane.b32.xlu0 %v1019, 113
        %v1036 = vpop.permute.xlu0 %1035
        %1037 = vrot.lane.b32.xlu0 %v1020, 113
        %v1038 = vpop.permute.xlu0 %1037
        %1039 = vrot.lane.b32.xlu0 %v1021, 113
        %v1040 = vpop.permute.xlu0 %1039
        %1041 = vrot.lane.b32.xlu0 %v1022, 113
        %v1042 = vpop.permute.xlu0 %1041
        %1043 = vrot.lane.b32.xlu0 %v1023, 113
        %v1044 = vpop.permute.xlu0 %1043
        %1045 = vrot.lane.b32.xlu0 %v1024, 113
        %v1046 = vpop.permute.xlu0 %1045
        %1047 = vrot.lane.b32.xlu0 %v1025, 113
        %v1048 = vpop.permute.xlu0 %1047
        %1049 = vrot.lane.b32.xlu0 %v1026, 113
        %v1050 = vpop.permute.xlu0 %1049
        %v1051 = vrot.slane %v1036, 4
        %v1052 = vrot.slane %v1038, 4
        %v1053 = vrot.slane %v1040, 4
        %v1054 = vrot.slane %v1042, 4
        %v1055 = vrot.slane %v1044, 4
        %v1056 = vrot.slane %v1046, 4
        %v1057 = vrot.slane %v1048, 4
        %v1058 = vrot.slane %v1050, 4
        %v1059 = vsel %vm702, %v1051, %v1052
        %v1060 = vsel %vm794, %v1036, %v1059
        %v1061 = vsel %vm702, %v1053, %v1054
        %v1062 = vsel %vm794, %v1040, %v1061
        %v1063 = vsel %vm702, %v1055, %v1056
        %v1064 = vsel %vm794, %v1044, %v1063
        %v1065 = vsel %vm702, %v1057, %v1058
        %v1066 = vsel %vm794, %v1048, %v1065
        %1071 = vst [vmem:[#allocation3 + $0xc0] sm:$0xff] %v1060
        %1072 = vst [vmem:[#allocation3 + $0xc8] sm:$0xff] %v1062
        %1073 = vst [vmem:[#allocation3 + $0xd0] sm:$0xff] %v1064
        %1074 = vst [vmem:[#allocation3 + $0xd8] sm:$0xff] %v1066
        %v1075 = vld [vmem:[#allocation2 + $0x4] sm:$0xff]
        %v1076 = vld [vmem:[#allocation2 + $0xc] sm:$0xf]
        %v1077 = vld [vmem:[#allocation2 + $0x14] sm:$0xff]
        %v1078 = vld [vmem:[#allocation2 + $0x1c] sm:$0xf]
        %v1079 = vld [vmem:[#allocation2 + $0x24] sm:$0xff]
        %v1080 = vld [vmem:[#allocation2 + $0x2c] sm:$0xf]
        %v1081 = vld [vmem:[#allocation2 + $0x34] sm:$0xff]
        %v1082 = vld [vmem:[#allocation2 + $0x3c] sm:$0xf]
        %1091 = vrot.lane.b32.xlu0 %v1075, 112
        %v1092 = vpop.permute.xlu0 %1091
        %1093 = vrot.lane.b32.xlu0 %v1076, 112
        %v1094 = vpop.permute.xlu0 %1093
        %1095 = vrot.lane.b32.xlu0 %v1077, 112
        %v1096 = vpop.permute.xlu0 %1095
        %1097 = vrot.lane.b32.xlu0 %v1078, 112
        %v1098 = vpop.permute.xlu0 %1097
        %1099 = vrot.lane.b32.xlu0 %v1079, 112
        %v1100 = vpop.permute.xlu0 %1099
        %1101 = vrot.lane.b32.xlu0 %v1080, 112
        %v1102 = vpop.permute.xlu0 %1101
        %1103 = vrot.lane.b32.xlu0 %v1081, 112
        %v1104 = vpop.permute.xlu0 %1103
        %1105 = vrot.lane.b32.xlu0 %v1082, 112
        %v1106 = vpop.permute.xlu0 %1105
        %v1107 = vrot.slane %v1092, 4
        %v1108 = vrot.slane %v1094, 4
        %v1109 = vrot.slane %v1096, 4
        %v1110 = vrot.slane %v1098, 4
        %v1111 = vrot.slane %v1100, 4
        %v1112 = vrot.slane %v1102, 4
        %v1113 = vrot.slane %v1104, 4
        %v1114 = vrot.slane %v1106, 4
        %v1115 = vsel %vm702, %v1107, %v1108
        %vm1116 = vcmask 916480
        %v1117 = vsel %vm1116, %v1092, %v1115
        %v1118 = vsel %vm702, %v1109, %v1110
        %v1119 = vsel %vm1116, %v1096, %v1118
        %v1120 = vsel %vm702, %v1111, %v1112
        %v1121 = vsel %vm1116, %v1100, %v1120
        %v1122 = vsel %vm702, %v1113, %v1114
        %v1123 = vsel %vm1116, %v1104, %v1122
        %1128 = vst [vmem:[#allocation3 + $0xe0] sm:$0xff] %v1117
        %1129 = vst [vmem:[#allocation3 + $0xe8] sm:$0xff] %v1119
        %1130 = vst [vmem:[#allocation3 + $0xf0] sm:$0xff] %v1121
        %1131 = vst [vmem:[#allocation3 + $0xf8] sm:$0xff] %v1123
        %v1132 = vld [vmem:[#allocation2 + $0x4] sm:$0xff]
        %v1133 = vld [vmem:[#allocation2 + $0xc] sm:$0xf]
        %v1134 = vld [vmem:[#allocation2 + $0x14] sm:$0xff]
        %v1135 = vld [vmem:[#allocation2 + $0x1c] sm:$0xf]
        %v1136 = vld [vmem:[#allocation2 + $0x24] sm:$0xff]
        %v1137 = vld [vmem:[#allocation2 + $0x2c] sm:$0xf]
        %v1138 = vld [vmem:[#allocation2 + $0x34] sm:$0xff]
        %v1139 = vld [vmem:[#allocation2 + $0x3c] sm:$0xf]
        %1140 = vrot.lane.b32.xlu0 %v790, 17
        %v1141 = vpop.permute.xlu0 %1140
        %v1142 = vrot.slane %v1141, 4
        %v1143 = vsel %vm704, %v1142, %v1141
        %vm1144 = vcmp.ne.s16.totalorder %v1143, 0
        %vm1145 = vcmp.ne.s16.totalorder %v1142, 0
        %v1146 = vsel %vm1144, %v1132, 0
        %v1147 = vsel %vm1145, %v1133, 0
        %v1148 = vsel %vm1144, %v1134, 0
        %v1149 = vsel %vm1145, %v1135, 0
        %v1150 = vsel %vm1144, %v1136, 0
        %v1151 = vsel %vm1145, %v1137, 0
        %v1152 = vsel %vm1144, %v1138, 0
        %v1153 = vsel %vm1145, %v1139, 0
        %1162 = vrot.lane.b32.xlu0 %v1146, 111
        %v1163 = vpop.permute.xlu0 %1162
        %1164 = vrot.lane.b32.xlu0 %v1147, 111
        %v1165 = vpop.permute.xlu0 %1164
        %1166 = vrot.lane.b32.xlu0 %v1148, 111
        %v1167 = vpop.permute.xlu0 %1166
        %1168 = vrot.lane.b32.xlu0 %v1149, 111
        %v1169 = vpop.permute.xlu0 %1168
        %1170 = vrot.lane.b32.xlu0 %v1150, 111
        %v1171 = vpop.permute.xlu0 %1170
        %1172 = vrot.lane.b32.xlu0 %v1151, 111
        %v1173 = vpop.permute.xlu0 %1172
        %1174 = vrot.lane.b32.xlu0 %v1152, 111
        %v1175 = vpop.permute.xlu0 %1174
        %1176 = vrot.lane.b32.xlu0 %v1153, 111
        %v1177 = vpop.permute.xlu0 %1176
        %v1178 = vrot.slane %v1163, 4
        %v1179 = vrot.slane %v1165, 4
        %v1180 = vrot.slane %v1167, 4
        %v1181 = vrot.slane %v1169, 4
        %v1182 = vrot.slane %v1171, 4
        %v1183 = vrot.slane %v1173, 4
        %v1184 = vrot.slane %v1175, 4
        %v1185 = vrot.slane %v1177, 4
        %v1186 = vsel %vm702, %v1178, %v1179
        %v1187 = vsel %vm658, %v1163, %v1186
        %v1188 = vsel %vm702, %v1180, %v1181
        %v1189 = vsel %vm658, %v1167, %v1188
        %v1190 = vsel %vm702, %v1182, %v1183
        %v1191 = vsel %vm658, %v1171, %v1190
        %v1192 = vsel %vm702, %v1184, %v1185
        %v1193 = vsel %vm658, %v1175, %v1192
        %1198 = vst [vmem:[#allocation3 + $0x100] sm:$0xff] %v1187
        %1199 = vst [vmem:[#allocation3 + $0x108] sm:$0xff] %v1189
        %1200 = vst [vmem:[#allocation3 + $0x110] sm:$0xff] %v1191
        %1201 = vst [vmem:[#allocation3 + $0x118] sm:$0xff] %v1193
        %v1202 = vld [vmem:[%s4] sm:$0xff]
        %v1203 = vld [vmem:[%s4 + $0x8] sm:$0xf]
        %v1204 = vld [vmem:[%s4 + $0xc] sm:$0xff]
        %v1205 = vld [vmem:[%s4 + $0x14] sm:$0xf]
        %v1206 = vld [vmem:[%s4 + $0x18] sm:$0xff]
        %v1207 = vld [vmem:[%s4 + $0x20] sm:$0xf]
        %v1208 = vld [vmem:[%s4 + $0x24] sm:$0xff]
        %v1209 = vld [vmem:[%s4 + $0x2c] sm:$0xf]
        %v1210 = vld [vmem:[#allocation3] sm:$0xff]
        %v1211 = vld [vmem:[#allocation3 + $0x8] sm:$0xff]
        %v1212 = vld [vmem:[#allocation3 + $0x10] sm:$0xff]
        %v1213 = vld [vmem:[#allocation3 + $0x18] sm:$0xff]
        %v1214 = vld [vmem:[#allocation3 + $0x20] sm:$0xff]
        %v1215 = vld [vmem:[#allocation3 + $0x28] sm:$0xff]
        %v1216 = vld [vmem:[#allocation3 + $0x30] sm:$0xff]
        %v1217 = vld [vmem:[#allocation3 + $0x38] sm:$0xff]
        %v1218 = vld [vmem:[#allocation3 + $0x40] sm:$0xff]
        %v1219 = vld [vmem:[#allocation3 + $0x48] sm:$0xff]
        %v1220 = vld [vmem:[#allocation3 + $0x50] sm:$0xff]
        %v1221 = vld [vmem:[#allocation3 + $0x58] sm:$0xff]
        %v1222 = vld [vmem:[#allocation3 + $0x60] sm:$0xff]
        %v1223 = vld [vmem:[#allocation3 + $0x68] sm:$0xff]
        %v1224 = vld [vmem:[#allocation3 + $0x70] sm:$0xff]
        %v1225 = vld [vmem:[#allocation3 + $0x78] sm:$0xff]
        %v1226 = vld [vmem:[#allocation3 + $0x80] sm:$0xff]
        %v1227 = vld [vmem:[#allocation3 + $0x88] sm:$0xff]
        %v1228 = vld [vmem:[#allocation3 + $0x90] sm:$0xff]
        %v1229 = vld [vmem:[#allocation3 + $0x98] sm:$0xff]
        %v1230 = vld [vmem:[#allocation3 + $0xa0] sm:$0xff]
        %v1231 = vld [vmem:[#allocation3 + $0xa8] sm:$0xff]
        %v1232 = vld [vmem:[#allocation3 + $0xb0] sm:$0xff]
        %v1233 = vld [vmem:[#allocation3 + $0xb8] sm:$0xff]
        %v1234 = vld [vmem:[#allocation3 + $0xc0] sm:$0xff]
        %v1235 = vld [vmem:[#allocation3 + $0xc8] sm:$0xff]
        %v1236 = vld [vmem:[#allocation3 + $0xd0] sm:$0xff]
        %v1237 = vld [vmem:[#allocation3 + $0xd8] sm:$0xff]
        %v1238 = vld [vmem:[#allocation3 + $0xe0] sm:$0xff]
        %v1239 = vld [vmem:[#allocation3 + $0xe8] sm:$0xff]
        %v1240 = vld [vmem:[#allocation3 + $0xf0] sm:$0xff]
        %v1241 = vld [vmem:[#allocation3 + $0xf8] sm:$0xff]
        %v1242 = vld [vmem:[#allocation3 + $0x100] sm:$0xff]
        %v1243 = vld [vmem:[#allocation3 + $0x108] sm:$0xff]
        %v1244 = vld [vmem:[#allocation3 + $0x110] sm:$0xff]
        %v1245 = vld [vmem:[#allocation3 + $0x118] sm:$0xff]
        %v1246 = vld [vmem:[%s5] sm:$0xff]
        %v1247 = vld [vmem:[%s5 + $0x8] sm:$0xff]
        %v1248 = vld [vmem:[%s5 + $0x10] sm:$0xff]
        %v1249 = vld [vmem:[%s5 + $0x18] sm:$0xff]
        %1251 = vset.pattern.permute.xlu0 0
        %1252 = vperm.xlu0 %1251, %v1246
        %v1253 = vpop.permute.xlu0 %1252
        %1256 = vset.pattern.permute.xlu0 0
        %1257 = vperm.xlu0 %1256, %v1247
        %v1258 = vpop.permute.xlu0 %1257
        %1261 = vset.pattern.permute.xlu0 0
        %1262 = vperm.xlu0 %1261, %v1248
        %v1263 = vpop.permute.xlu0 %1262
        %1266 = vset.pattern.permute.xlu0 0
        %1267 = vperm.xlu0 %1266, %v1249
        %v1268 = vpop.permute.xlu0 %1267
        %v1278 = vunpack.c.l.b16 %v1202
        %v1279 = vunpack.c.h.b16 %v1202
        %v1280 = vunpack.c.l.b16 %v1203
        %v1281 = vunpack.c.l.b16 %v1204
        %v1282 = vunpack.c.h.b16 %v1204
        %v1283 = vunpack.c.l.b16 %v1205
        %v1284 = vunpack.c.l.b16 %v1206
        %v1285 = vunpack.c.h.b16 %v1206
        %v1286 = vunpack.c.l.b16 %v1207
        %v1287 = vunpack.c.l.b16 %v1208
        %v1288 = vunpack.c.h.b16 %v1208
        %v1289 = vunpack.c.l.b16 %v1209
        %v1290 = vpack.c.b16 %v1281, %v1278
        %v1291 = vpack.c.b16 %v1282, %v1279
        %v1292 = vpack.c.b16 %v1283, %v1280
        %v1293 = vpack.c.b16 %v1287, %v1284
        %v1294 = vpack.c.b16 %v1288, %v1285
        %v1295 = vpack.c.b16 %v1289, %v1286
        %v1336 = vunpack.c.l.b16 %v1210
        %v1337 = vunpack.c.h.b16 %v1210
        %v1338 = vunpack.c.l.b16 %v1211
        %v1339 = vunpack.c.h.b16 %v1211
        %v1340 = vunpack.c.l.b16 %v1212
        %v1341 = vunpack.c.h.b16 %v1212
        %v1342 = vunpack.c.l.b16 %v1213
        %v1343 = vunpack.c.h.b16 %v1213
        %v1344 = vunpack.c.l.b16 %v1214
        %v1345 = vunpack.c.h.b16 %v1214
        %v1346 = vunpack.c.l.b16 %v1215
        %v1347 = vunpack.c.h.b16 %v1215
        %v1348 = vunpack.c.l.b16 %v1216
        %v1349 = vunpack.c.h.b16 %v1216
        %v1350 = vunpack.c.l.b16 %v1217
        %v1351 = vunpack.c.h.b16 %v1217
        %v1352 = vunpack.c.l.b16 %v1218
        %v1353 = vunpack.c.h.b16 %v1218
        %v1354 = vunpack.c.l.b16 %v1219
        %v1355 = vunpack.c.h.b16 %v1219
        %v1356 = vunpack.c.l.b16 %v1220
        %v1357 = vunpack.c.h.b16 %v1220
        %v1358 = vunpack.c.l.b16 %v1221
        %v1359 = vunpack.c.h.b16 %v1221
        %v1360 = vunpack.c.l.b16 %v1222
        %v1361 = vunpack.c.h.b16 %v1222
        %v1362 = vunpack.c.l.b16 %v1223
        %v1363 = vunpack.c.h.b16 %v1223
        %v1364 = vunpack.c.l.b16 %v1224
        %v1365 = vunpack.c.h.b16 %v1224
        %v1366 = vunpack.c.l.b16 %v1225
        %v1367 = vunpack.c.h.b16 %v1225
        %v1368 = vunpack.c.l.b16 %v1226
        %v1369 = vunpack.c.h.b16 %v1226
        %v1370 = vunpack.c.l.b16 %v1227
        %v1371 = vunpack.c.h.b16 %v1227
        %v1372 = vunpack.c.l.b16 %v1228
        %v1373 = vunpack.c.h.b16 %v1228
        %v1374 = vunpack.c.l.b16 %v1229
        %v1375 = vunpack.c.h.b16 %v1229
        %v1376 = vunpack.c.l.b16 %v1230
        %v1377 = vunpack.c.h.b16 %v1230
        %v1378 = vunpack.c.l.b16 %v1231
        %v1379 = vunpack.c.h.b16 %v1231
        %v1380 = vunpack.c.l.b16 %v1232
        %v1381 = vunpack.c.h.b16 %v1232
        %v1382 = vunpack.c.l.b16 %v1233
        %v1383 = vunpack.c.h.b16 %v1233
        %v1384 = vunpack.c.l.b16 %v1234
        %v1385 = vunpack.c.h.b16 %v1234
        %v1386 = vunpack.c.l.b16 %v1235
        %v1387 = vunpack.c.h.b16 %v1235
        %v1388 = vunpack.c.l.b16 %v1236
        %v1389 = vunpack.c.h.b16 %v1236
        %v1390 = vunpack.c.l.b16 %v1237
        %v1391 = vunpack.c.h.b16 %v1237
        %v1392 = vunpack.c.l.b16 %v1238
        %v1393 = vunpack.c.h.b16 %v1238
        %v1394 = vunpack.c.l.b16 %v1239
        %v1395 = vunpack.c.h.b16 %v1239
        %v1396 = vunpack.c.l.b16 %v1240
        %v1397 = vunpack.c.h.b16 %v1240
        %v1398 = vunpack.c.l.b16 %v1241
        %v1399 = vunpack.c.h.b16 %v1241
        %v1400 = vunpack.c.l.b16 %v1242
        %v1401 = vunpack.c.h.b16 %v1242
        %v1402 = vunpack.c.l.b16 %v1243
        %v1403 = vunpack.c.h.b16 %v1243
        %v1404 = vunpack.c.l.b16 %v1244
        %v1405 = vunpack.c.h.b16 %v1244
        %v1406 = vunpack.c.l.b16 %v1245
        %v1407 = vunpack.c.h.b16 %v1245
        %v1408 = vpack.c.b16 %v1338, %v1336
        %v1409 = vpack.c.b16 %v1339, %v1337
        %v1410 = vpack.c.b16 %v1342, %v1340
        %v1411 = vpack.c.b16 %v1343, %v1341
        %v1412 = vpack.c.b16 %v1346, %v1344
        %v1413 = vpack.c.b16 %v1347, %v1345
        %v1414 = vpack.c.b16 %v1350, %v1348
        %v1415 = vpack.c.b16 %v1351, %v1349
        %v1416 = vpack.c.b16 %v1354, %v1352
        %v1417 = vpack.c.b16 %v1355, %v1353
        %v1418 = vpack.c.b16 %v1358, %v1356
        %v1419 = vpack.c.b16 %v1359, %v1357
        %v1420 = vpack.c.b16 %v1362, %v1360
        %v1421 = vpack.c.b16 %v1363, %v1361
        %v1422 = vpack.c.b16 %v1366, %v1364
        %v1423 = vpack.c.b16 %v1367, %v1365
        %v1424 = vpack.c.b16 %v1370, %v1368
        %v1425 = vpack.c.b16 %v1371, %v1369
        %v1426 = vpack.c.b16 %v1374, %v1372
        %v1427 = vpack.c.b16 %v1375, %v1373
        %v1428 = vpack.c.b16 %v1378, %v1376
        %v1429 = vpack.c.b16 %v1379, %v1377
        %v1430 = vpack.c.b16 %v1382, %v1380
        %v1431 = vpack.c.b16 %v1383, %v1381
        %v1432 = vpack.c.b16 %v1386, %v1384
        %v1433 = vpack.c.b16 %v1387, %v1385
        %v1434 = vpack.c.b16 %v1390, %v1388
        %v1435 = vpack.c.b16 %v1391, %v1389
        %v1436 = vpack.c.b16 %v1394, %v1392
        %v1437 = vpack.c.b16 %v1395, %v1393
        %v1438 = vpack.c.b16 %v1398, %v1396
        %v1439 = vpack.c.b16 %v1399, %v1397
        %v1440 = vpack.c.b16 %v1402, %v1400
        %v1441 = vpack.c.b16 %v1403, %v1401
        %v1442 = vpack.c.b16 %v1406, %v1404
        %v1443 = vpack.c.b16 %v1407, %v1405
        %vm1480 = vcmask 261120
        %v1482 = vsel %vm1480, %v1292, 0
        %v1485 = vsel %vm1480, %v1295, 0
        %1487 = vmatprep.subr.bf16.mxu0 %v1423
        %1488 = vmatpush1.bf16.msra.mxu0 %v1422
        %1489 = vmatprep.subr.bf16.mxu0 %v1421
        %1490 = vmatpush1.bf16.msra.mxu0 %v1420
        %1491 = vmatprep.subr.bf16.mxu0 %v1419
        %1492 = vmatpush1.bf16.msra.mxu0 %v1418
        %1493 = vmatprep.subr.bf16.mxu0 %v1417
        %1494 = vmatpush1.bf16.msra.mxu0 %v1416
        %1495 = vmatprep.subr.bf16.mxu0 %v1415
        %1496 = vmatpush1.bf16.msra.mxu0 %v1414
        %1497 = vmatprep.subr.bf16.mxu0 %v1413
        %1498 = vmatpush1.bf16.msra.mxu0 %v1412
        %1499 = vmatprep.subr.bf16.mxu0 %v1411
        %1500 = vmatpush1.bf16.msra.mxu0 %v1410
        %1501 = vmatprep.subr.bf16.mxu0 %v1409
        %1502 = vmatpush1.bf16.msra.mxu0 %v1408
        %1503 = vmatprep.subr.bf16.mxu0 %v1439
        %1504 = vmatpush2.bf16.msra.mxu0 %v1438
        %1505 = vmatprep.subr.bf16.mxu0 %v1437
        %1506 = vmatpush2.bf16.msra.mxu0 %v1436
        %1507 = vmatprep.subr.bf16.mxu0 %v1435
        %1508 = vmatpush2.bf16.msra.mxu0 %v1434
        %1509 = vmatprep.subr.bf16.mxu0 %v1433
        %1510 = vmatpush2.bf16.msra.mxu0 %v1432
        %1511 = vmatprep.subr.bf16.mxu0 %v1431
        %1512 = vmatpush2.bf16.msra.mxu0 %v1430
        %1513 = vmatprep.subr.bf16.mxu0 %v1429
        %1514 = vmatpush2.bf16.msra.mxu0 %v1428
        %1515 = vmatprep.subr.bf16.mxu0 %v1427
        %1516 = vmatpush2.bf16.msra.mxu0 %v1426
        %1517 = vmatprep.subr.bf16.mxu0 %v1425
        %1518 = vmatpush2.bf16.msra.mxu0 %v1424
        %1519 = vmatprep.mubr.bf16.mxu0 %v1291
        %1520 = vmatmul.mubr.bf16.gmra.mxu0 %v1290
        %v1521 = vpop.f32.mrf.mxu0
        %v1522 = vadd.f32 %v1253, %v1521
        %v1523 = vpop.f32.mrf.mxu0
        %v1524 = vadd.f32 %v1253, %v1523
        %v1525 = vpop.f32.mrf.mxu0
        %v1526 = vadd.f32 %v1258, %v1525
        %v1527 = vpop.f32.mrf.mxu0
        %v1528 = vadd.f32 %v1258, %v1527
        %1529 = vmatprep.mubr.bf16.mxu0 %v1294
        %1530 = vmatmul.mubr.bf16.gmra.mxu0 %v1293
        %v1531 = vpop.f32.mrf.mxu0
        %v1532 = vadd.f32 %v1263, %v1531
        %v1533 = vpop.f32.mrf.mxu0
        %v1534 = vadd.f32 %v1263, %v1533
        %v1535 = vpop.f32.mrf.mxu0
        %v1536 = vadd.f32 %v1268, %v1535
        %v1537 = vpop.f32.mrf.mxu0
        %v1538 = vadd.f32 %v1268, %v1537
        %1539 = vdwg.mxu0
        %1540 = vmatprep.subr.bf16.mxu0 0
        %1541 = vmatpush1.bf16.msra.mxu0 0
        %1542 = vmatprep.subr.bf16.mxu0 0
        %1543 = vmatpush1.bf16.msra.mxu0 0
        %1544 = vmatprep.subr.bf16.mxu0 0
        %1545 = vmatpush1.bf16.msra.mxu0 0
        %1546 = vmatprep.subr.bf16.mxu0 0
        %1547 = vmatpush1.bf16.msra.mxu0 0
        %1548 = vmatprep.subr.bf16.mxu0 0
        %1549 = vmatpush1.bf16.msra.mxu0 0
        %1550 = vmatprep.subr.bf16.mxu0 0
        %1551 = vmatpush1.bf16.msra.mxu0 0
        %1552 = vmatprep.subr.bf16.mxu0 %v1443
        %1553 = vmatpush1.bf16.msra.mxu0 %v1442
        %1554 = vmatprep.subr.bf16.mxu0 %v1441
        %1555 = vmatpush1.bf16.msra.mxu0 %v1440
        %1556 = vmatprep.subr.bf16.mxu0 0
        %1557 = vmatpush2.bf16.msra.mxu0 0
        %1558 = vmatprep.subr.bf16.mxu0 0
        %1559 = vmatpush2.bf16.msra.mxu0 0
        %1560 = vmatprep.subr.bf16.mxu0 0
        %1561 = vmatpush2.bf16.msra.mxu0 0
        %1562 = vmatprep.subr.bf16.mxu0 0
        %1563 = vmatpush2.bf16.msra.mxu0 0
        %1564 = vmatprep.subr.bf16.mxu0 0
        %1565 = vmatpush2.bf16.msra.mxu0 0
        %1566 = vmatprep.subr.bf16.mxu0 0
        %1567 = vmatpush2.bf16.msra.mxu0 0
        %1568 = vmatprep.subr.bf16.mxu0 0
        %1569 = vmatpush2.bf16.msra.mxu0 0
        %1570 = vmatprep.subr.bf16.mxu0 0
        %1571 = vmatpush2.bf16.msra.mxu0 0
        %1572 = vmatprep.mubr.bf16.mxu0 0
        %1573 = vmatmul.mubr.bf16.gmra.mxu0 %v1482
        %v1574 = vpop.f32.mrf.mxu0
        %v1575 = vadd.f32 %v1522, %v1574
        %v1576 = vpop.f32.mrf.mxu0
        %v1577 = vadd.f32 %v1524, %v1576
        %v1578 = vpop.f32.mrf.mxu0
        %v1579 = vadd.f32 %v1526, %v1578
        %v1580 = vpop.f32.mrf.mxu0
        %v1581 = vadd.f32 %v1528, %v1580
        %1582 = vmatprep.mubr.bf16.mxu0 0
        %1583 = vmatmul.mubr.bf16.gmra.mxu0 %v1485
        %v1584 = vpop.f32.mrf.mxu0
        %v1585 = vadd.f32 %v1532, %v1584
        %v1586 = vpop.f32.mrf.mxu0
        %v1587 = vadd.f32 %v1534, %v1586
        %v1588 = vpop.f32.mrf.mxu0
        %v1589 = vadd.f32 %v1536, %v1588
        %v1590 = vpop.f32.mrf.mxu0
        %v1591 = vadd.f32 %v1538, %v1590
        %1592 = vdwg.mxu0
        %v1593 = vld [vmem:[%s377] sm:$0xff]
        %v1594 = vld [vmem:[%s377 + $0x8] sm:$0xff]
        %v1595 = vld [vmem:[%s377 + $0x10] sm:$0xff]
        %v1596 = vld [vmem:[%s377 + $0x18] sm:$0xff]
        %1598 = vset.pattern.permute.xlu0 0
        %1599 = vperm.xlu0 %1598, %v1593
        %v1600 = vpop.permute.xlu0 %1599
        %1603 = vset.pattern.permute.xlu0 0
        %1604 = vperm.xlu0 %1603, %v1594
        %v1605 = vpop.permute.xlu0 %1604
        %1608 = vset.pattern.permute.xlu0 0
        %1609 = vperm.xlu0 %1608, %v1595
        %v1610 = vpop.permute.xlu0 %1609
        %1613 = vset.pattern.permute.xlu0 0
        %1614 = vperm.xlu0 %1613, %v1596
        %v1615 = vpop.permute.xlu0 %1614
        %v1617 = vadd.f32 %v1575, %v1600
        %v1618 = vadd.f32 %v1577, %v1600
        %v1619 = vadd.f32 %v1579, %v1605
        %v1620 = vadd.f32 %v1581, %v1605
        %v1621 = vadd.f32 %v1585, %v1610
        %v1622 = vadd.f32 %v1587, %v1610
        %v1623 = vadd.f32 %v1589, %v1615
        %v1624 = vadd.f32 %v1591, %v1615
        %v1625 = vld [vmem:[%s6] sm:$0xff]
        %v1626 = vld [vmem:[%s6 + $0x8] sm:$0xff]
        %v1627 = vld [vmem:[%s6 + $0x10] sm:$0xff]
        %v1628 = vld [vmem:[%s6 + $0x18] sm:$0xff]
        %v1629 = vld [vmem:[%s7] sm:$0xff]
        %v1630 = vld [vmem:[%s7 + $0x8] sm:$0xff]
        %v1631 = vld [vmem:[%s7 + $0x10] sm:$0xff]
        %v1632 = vld [vmem:[%s7 + $0x18] sm:$0xff]
        %v1633 = vadd.f32 %v1617, %v1618
        %1634 = vadd.xlane.f32.xlu0 %v1633
        %v1635 = vpop.xlane.xlu0 %1634
        %v1636 = vadd.f32 %v1619, %v1620
        %1637 = vadd.xlane.f32.xlu0 %v1636
        %v1638 = vpop.xlane.xlu0 %1637
        %v1639 = vadd.f32 %v1621, %v1622
        %1640 = vadd.xlane.f32.xlu0 %v1639
        %v1641 = vpop.xlane.xlu0 %1640
        %v1642 = vadd.f32 %v1623, %v1624
        %1643 = vadd.xlane.f32.xlu0 %v1642
        %v1644 = vpop.xlane.xlu0 %1643
        %v1645 = vmul.f32 %v1635, %v448
        %v1646 = vmul.f32 %v1638, %v448
        %v1647 = vmul.f32 %v1641, %v448
        %v1648 = vmul.f32 %v1644, %v448
        %v1649 = vsub.f32 %v1617, %v1645
        %v1650 = vsub.f32 %v1618, %v1645
        %v1651 = vsub.f32 %v1619, %v1646
        %v1652 = vsub.f32 %v1620, %v1646
        %v1653 = vsub.f32 %v1621, %v1647
        %v1654 = vsub.f32 %v1622, %v1647
        %v1655 = vsub.f32 %v1623, %v1648
        %v1656 = vsub.f32 %v1624, %v1648
        %v1657 = vmul.f32 %v1649, %v1649
        %v1658 = vmul.f32 %v1650, %v1650
        %v1659 = vmul.f32 %v1651, %v1651
        %v1660 = vmul.f32 %v1652, %v1652
        %v1661 = vmul.f32 %v1653, %v1653
        %v1662 = vmul.f32 %v1654, %v1654
        %v1663 = vmul.f32 %v1655, %v1655
        %v1664 = vmul.f32 %v1656, %v1656
        %v1665 = vadd.f32 %v1657, %v1658
        %1666 = vadd.xlane.f32.xlu0 %v1665
        %v1667 = vpop.xlane.xlu0 %1666
        %v1668 = vadd.f32 %v1659, %v1660
        %1669 = vadd.xlane.f32.xlu0 %v1668
        %v1670 = vpop.xlane.xlu0 %1669
        %v1671 = vadd.f32 %v1661, %v1662
        %1672 = vadd.xlane.f32.xlu0 %v1671
        %v1673 = vpop.xlane.xlu0 %1672
        %v1674 = vadd.f32 %v1663, %v1664
        %1675 = vadd.xlane.f32.xlu0 %v1674
        %v1676 = vpop.xlane.xlu0 %1675
        %v1677 = vmul.f32 %v1667, %v448
        %v1678 = vmul.f32 %v1670, %v448
        %v1679 = vmul.f32 %v1673, %v448
        %v1680 = vmul.f32 %v1676, %v448
        %v1681 = vadd.f32 %v1677, 1e-05
        %v1682 = vadd.f32 %v1678, 1e-05
        %v1683 = vadd.f32 %v1679, 1e-05
        %v1684 = vadd.f32 %v1680, 1e-05
        %v1685 = vrsqrt.pop %v1681
        %v1686 = vrsqrt.pop %v1682
        %v1687 = vrsqrt.pop %v1683
        %v1688 = vrsqrt.pop %v1684
        %v1689 = vmul.f32 %v1649, %v1685
        %v1690 = vmul.f32 %v1650, %v1685
        %v1691 = vmul.f32 %v1651, %v1686
        %v1692 = vmul.f32 %v1652, %v1686
        %v1693 = vmul.f32 %v1653, %v1687
        %v1694 = vmul.f32 %v1654, %v1687
        %v1695 = vmul.f32 %v1655, %v1688
        %v1696 = vmul.f32 %v1656, %v1688
        %1698 = vset.pattern.permute.xlu0 0
        %1699 = vperm.xlu0 %1698, %v1625
        %v1700 = vpop.permute.xlu0 %1699
        %1703 = vset.pattern.permute.xlu0 0
        %1704 = vperm.xlu0 %1703, %v1626
        %v1705 = vpop.permute.xlu0 %1704
        %1708 = vset.pattern.permute.xlu0 0
        %1709 = vperm.xlu0 %1708, %v1627
        %v1710 = vpop.permute.xlu0 %1709
        %1713 = vset.pattern.permute.xlu0 0
        %1714 = vperm.xlu0 %1713, %v1628
        %v1715 = vpop.permute.xlu0 %1714
        %v1717 = vmul.f32 %v1689, %v1700
        %v1718 = vmul.f32 %v1690, %v1700
        %v1719 = vmul.f32 %v1691, %v1705
        %v1720 = vmul.f32 %v1692, %v1705
        %v1721 = vmul.f32 %v1693, %v1710
        %v1722 = vmul.f32 %v1694, %v1710
        %v1723 = vmul.f32 %v1695, %v1715
        %v1724 = vmul.f32 %v1696, %v1715
        %1726 = vset.pattern.permute.xlu0 0
        %1727 = vperm.xlu0 %1726, %v1629
        %v1728 = vpop.permute.xlu0 %1727
        %1731 = vset.pattern.permute.xlu0 0
        %1732 = vperm.xlu0 %1731, %v1630
        %v1733 = vpop.permute.xlu0 %1732
        %1736 = vset.pattern.permute.xlu0 0
        %1737 = vperm.xlu0 %1736, %v1631
        %v1738 = vpop.permute.xlu0 %1737
        %1741 = vset.pattern.permute.xlu0 0
        %1742 = vperm.xlu0 %1741, %v1632
        %v1743 = vpop.permute.xlu0 %1742
        %v1745 = vadd.f32 %v1717, %v1728
        %v1746 = vadd.f32 %v1718, %v1728
        %v1747 = vadd.f32 %v1719, %v1733
        %v1748 = vadd.f32 %v1720, %v1733
        %v1749 = vadd.f32 %v1721, %v1738
        %v1750 = vadd.f32 %v1722, %v1738
        %v1751 = vadd.f32 %v1723, %v1743
        %v1752 = vadd.f32 %v1724, %v1743
        %v1753 = vxor.u32 %v1745, 2147483648
        %v1754 = vxor.u32 %v1746, 2147483648
        %v1755 = vxor.u32 %v1747, 2147483648
        %v1756 = vxor.u32 %v1748, 2147483648
        %v1757 = vxor.u32 %v1749, 2147483648
        %v1758 = vxor.u32 %v1750, 2147483648
        %v1759 = vxor.u32 %v1751, 2147483648
        %v1760 = vxor.u32 %v1752, 2147483648
        %v1761 = vmul.f32 %v1753, 1.442695
        %v1762 = vpow.pop %v1761
        %v1763 = vmul.f32 %v1754, 1.442695
        %v1764 = vpow.pop %v1763
        %v1765 = vmul.f32 %v1755, 1.442695
        %v1766 = vpow.pop %v1765
        %v1767 = vmul.f32 %v1756, 1.442695
        %v1768 = vpow.pop %v1767
        %v1769 = vmul.f32 %v1757, 1.442695
        %v1770 = vpow.pop %v1769
        %v1771 = vmul.f32 %v1758, 1.442695
        %v1772 = vpow.pop %v1771
        %v1773 = vmul.f32 %v1759, 1.442695
        %v1774 = vpow.pop %v1773
        %v1775 = vmul.f32 %v1760, 1.442695
        %v1776 = vpow.pop %v1775
        %v1777 = vadd.f32 %v1762, 1.0
        %v1778 = vadd.f32 %v1764, 1.0
        %v1779 = vadd.f32 %v1766, 1.0
        %v1780 = vadd.f32 %v1768, 1.0
        %v1781 = vadd.f32 %v1770, 1.0
        %v1782 = vadd.f32 %v1772, 1.0
        %v1783 = vadd.f32 %v1774, 1.0
        %v1784 = vadd.f32 %v1776, 1.0
        %v1785 = vrcp.pop %v1777
        %v1786 = vmul.f32 1.0, %v1785
        %v1787 = vrcp.pop %v1778
        %v1788 = vmul.f32 1.0, %v1787
        %v1789 = vrcp.pop %v1779
        %v1790 = vmul.f32 1.0, %v1789
        %v1791 = vrcp.pop %v1780
        %v1792 = vmul.f32 1.0, %v1791
        %v1793 = vrcp.pop %v1781
        %v1794 = vmul.f32 1.0, %v1793
        %v1795 = vrcp.pop %v1782
        %v1796 = vmul.f32 1.0, %v1795
        %v1797 = vrcp.pop %v1783
        %v1798 = vmul.f32 1.0, %v1797
        %v1799 = vrcp.pop %v1784
        %v1800 = vmul.f32 1.0, %v1799
        %v1801 = vmul.f32 %v1745, %v1786
        %v1802 = vmul.f32 %v1746, %v1788
        %v1803 = vmul.f32 %v1747, %v1790
        %v1804 = vmul.f32 %v1748, %v1792
        %v1805 = vmul.f32 %v1749, %v1794
        %v1806 = vmul.f32 %v1750, %v1796
        %v1807 = vmul.f32 %v1751, %v1798
        %v1808 = vmul.f32 %v1752, %v1800
        %v1809 = vpack.c.bf16 %v1803, %v1801
        %v1810 = vpack.c.bf16 %v1804, %v1802
        %v1811 = vpack.c.bf16 %v1807, %v1805
        %v1812 = vpack.c.bf16 %v1808, %v1806
        %v1817 = vunpack.c.l.b16 %v1809
        %v1818 = vunpack.c.l.b16 %v1810
        %v1819 = vunpack.c.h.b16 %v1809
        %v1820 = vunpack.c.h.b16 %v1810
        %v1821 = vunpack.c.l.b16 %v1811
        %v1822 = vunpack.c.l.b16 %v1812
        %v1823 = vunpack.c.h.b16 %v1811
        %v1824 = vunpack.c.h.b16 %v1812
        %v1825 = vpack.c.b16 %v1818, %v1817
        %v1826 = vpack.c.b16 %v1820, %v1819
        %v1827 = vpack.c.b16 %v1822, %v1821
        %v1828 = vpack.c.b16 %v1824, %v1823
        %1833 = vst [vmem:[#allocation2 + $0x4] sm:$0xff] %v1825
        %1834 = vst [vmem:[#allocation2 + $0x14] sm:$0xff] %v1826
        %1835 = vst [vmem:[#allocation2 + $0x24] sm:$0xff] %v1827
        %1836 = vst [vmem:[#allocation2 + $0x34] sm:$0xff] %v1828
        %v1837 = vld [vmem:[#allocation2] sm:$0xff]
        %v1838 = vld [vmem:[#allocation2 + $0x8] sm:$0xf]
        %v1839 = vld [vmem:[#allocation2 + $0x10] sm:$0xff]
        %v1840 = vld [vmem:[#allocation2 + $0x18] sm:$0xf]
        %v1841 = vld [vmem:[#allocation2 + $0x20] sm:$0xff]
        %v1842 = vld [vmem:[#allocation2 + $0x28] sm:$0xf]
        %v1843 = vld [vmem:[#allocation2 + $0x30] sm:$0xff]
        %v1844 = vld [vmem:[#allocation2 + $0x38] sm:$0xf]
        %v1845 = vsel %vm660, %v1837, 0
        %v1846 = vsel %vm661, %v1838, 0
        %v1847 = vsel %vm660, %v1839, 0
        %v1848 = vsel %vm661, %v1840, 0
        %v1849 = vsel %vm660, %v1841, 0
        %v1850 = vsel %vm661, %v1842, 0
        %v1851 = vsel %vm660, %v1843, 0
        %v1852 = vsel %vm661, %v1844, 0
        %1861 = vrot.lane.b32.xlu0 %v1845, 17
        %v1862 = vpop.permute.xlu0 %1861
        %1863 = vrot.lane.b32.xlu0 %v1846, 17
        %v1864 = vpop.permute.xlu0 %1863
        %1865 = vrot.lane.b32.xlu0 %v1847, 17
        %v1866 = vpop.permute.xlu0 %1865
        %1867 = vrot.lane.b32.xlu0 %v1848, 17
        %v1868 = vpop.permute.xlu0 %1867
        %1869 = vrot.lane.b32.xlu0 %v1849, 17
        %v1870 = vpop.permute.xlu0 %1869
        %1871 = vrot.lane.b32.xlu0 %v1850, 17
        %v1872 = vpop.permute.xlu0 %1871
        %1873 = vrot.lane.b32.xlu0 %v1851, 17
        %v1874 = vpop.permute.xlu0 %1873
        %1875 = vrot.lane.b32.xlu0 %v1852, 17
        %v1876 = vpop.permute.xlu0 %1875
        %v1877 = vrot.slane %v1862, 4
        %v1878 = vrot.slane %v1864, 4
        %v1879 = vrot.slane %v1866, 4
        %v1880 = vrot.slane %v1868, 4
        %v1881 = vrot.slane %v1870, 4
        %v1882 = vrot.slane %v1872, 4
        %v1883 = vrot.slane %v1874, 4
        %v1884 = vrot.slane %v1876, 4
        %v1885 = vsel %vm702, %v1877, %v1878
        %v1886 = vsel %vm704, %v1862, %v1885
        %v1887 = vsel %vm702, %v1879, %v1880
        %v1888 = vsel %vm704, %v1866, %v1887
        %v1889 = vsel %vm702, %v1881, %v1882
        %v1890 = vsel %vm704, %v1870, %v1889
        %v1891 = vsel %vm702, %v1883, %v1884
        %v1892 = vsel %vm704, %v1874, %v1891
        %1897 = vst [vmem:[#allocation3] sm:$0xff] %v1886
        %1898 = vst [vmem:[#allocation3 + $0x8] sm:$0xff] %v1888
        %1899 = vst [vmem:[#allocation3 + $0x10] sm:$0xff] %v1890
        %1900 = vst [vmem:[#allocation3 + $0x18] sm:$0xff] %v1892
        %v1901 = vld [vmem:[#allocation2] sm:$0xff]
        %v1902 = vld [vmem:[#allocation2 + $0x8] sm:$0xf]
        %v1903 = vld [vmem:[#allocation2 + $0x10] sm:$0xff]
        %v1904 = vld [vmem:[#allocation2 + $0x18] sm:$0xf]
        %v1905 = vld [vmem:[#allocation2 + $0x20] sm:$0xff]
        %v1906 = vld [vmem:[#allocation2 + $0x28] sm:$0xf]
        %v1907 = vld [vmem:[#allocation2 + $0x30] sm:$0xff]
        %v1908 = vld [vmem:[#allocation2 + $0x38] sm:$0xf]
        %1917 = vrot.lane.b32.xlu0 %v1901, 16
        %v1918 = vpop.permute.xlu0 %1917
        %1919 = vrot.lane.b32.xlu0 %v1902, 16
        %v1920 = vpop.permute.xlu0 %1919
        %1921 = vrot.lane.b32.xlu0 %v1903, 16
        %v1922 = vpop.permute.xlu0 %1921
        %1923 = vrot.lane.b32.xlu0 %v1904, 16
        %v1924 = vpop.permute.xlu0 %1923
        %1925 = vrot.lane.b32.xlu0 %v1905, 16
        %v1926 = vpop.permute.xlu0 %1925
        %1927 = vrot.lane.b32.xlu0 %v1906, 16
        %v1928 = vpop.permute.xlu0 %1927
        %1929 = vrot.lane.b32.xlu0 %v1907, 16
        %v1930 = vpop.permute.xlu0 %1929
        %1931 = vrot.lane.b32.xlu0 %v1908, 16
        %v1932 = vpop.permute.xlu0 %1931
        %v1933 = vrot.slane %v1918, 4
        %v1934 = vrot.slane %v1920, 4
        %v1935 = vrot.slane %v1922, 4
        %v1936 = vrot.slane %v1924, 4
        %v1937 = vrot.slane %v1926, 4
        %v1938 = vrot.slane %v1928, 4
        %v1939 = vrot.slane %v1930, 4
        %v1940 = vrot.slane %v1932, 4
        %v1941 = vsel %vm702, %v1933, %v1934
        %v1942 = vsel %vm761, %v1918, %v1941
        %v1943 = vsel %vm702, %v1935, %v1936
        %v1944 = vsel %vm761, %v1922, %v1943
        %v1945 = vsel %vm702, %v1937, %v1938
        %v1946 = vsel %vm761, %v1926, %v1945
        %v1947 = vsel %vm702, %v1939, %v1940
        %v1948 = vsel %vm761, %v1930, %v1947
        %1953 = vst [vmem:[#allocation3 + $0x20] sm:$0xff] %v1942
        %1954 = vst [vmem:[#allocation3 + $0x28] sm:$0xff] %v1944
        %1955 = vst [vmem:[#allocation3 + $0x30] sm:$0xff] %v1946
        %1956 = vst [vmem:[#allocation3 + $0x38] sm:$0xff] %v1948
        %v1957 = vld [vmem:[#allocation2] sm:$0xff]
        %v1958 = vld [vmem:[#allocation2 + $0x8] sm:$0xf]
        %v1959 = vld [vmem:[#allocation2 + $0x10] sm:$0xff]
        %v1960 = vld [vmem:[#allocation2 + $0x18] sm:$0xf]
        %v1961 = vld [vmem:[#allocation2 + $0x20] sm:$0xff]
        %v1962 = vld [vmem:[#allocation2 + $0x28] sm:$0xf]
        %v1963 = vld [vmem:[#allocation2 + $0x30] sm:$0xff]
        %v1964 = vld [vmem:[#allocation2 + $0x38] sm:$0xf]
        %v1965 = vsel %vm796, %v1957, 0
        %v1966 = vsel %vm797, %v1958, 0
        %v1967 = vsel %vm796, %v1959, 0
        %v1968 = vsel %vm797, %v1960, 0
        %v1969 = vsel %vm796, %v1961, 0
        %v1970 = vsel %vm797, %v1962, 0
        %v1971 = vsel %vm796, %v1963, 0
        %v1972 = vsel %vm797, %v1964, 0
        %1981 = vrot.lane.b32.xlu0 %v1965, 15
        %v1982 = vpop.permute.xlu0 %1981
        %1983 = vrot.lane.b32.xlu0 %v1966, 15
        %v1984 = vpop.permute.xlu0 %1983
        %1985 = vrot.lane.b32.xlu0 %v1967, 15
        %v1986 = vpop.permute.xlu0 %1985
        %1987 = vrot.lane.b32.xlu0 %v1968, 15
        %v1988 = vpop.permute.xlu0 %1987
        %1989 = vrot.lane.b32.xlu0 %v1969, 15
        %v1990 = vpop.permute.xlu0 %1989
        %1991 = vrot.lane.b32.xlu0 %v1970, 15
        %v1992 = vpop.permute.xlu0 %1991
        %1993 = vrot.lane.b32.xlu0 %v1971, 15
        %v1994 = vpop.permute.xlu0 %1993
        %1995 = vrot.lane.b32.xlu0 %v1972, 15
        %v1996 = vpop.permute.xlu0 %1995
        %v1997 = vrot.slane %v1982, 4
        %v1998 = vrot.slane %v1984, 4
        %v1999 = vrot.slane %v1986, 4
        %v2000 = vrot.slane %v1988, 4
        %v2001 = vrot.slane %v1990, 4
        %v2002 = vrot.slane %v1992, 4
        %v2003 = vrot.slane %v1994, 4
        %v2004 = vrot.slane %v1996, 4
        %v2005 = vsel %vm702, %v1997, %v1998
        %v2006 = vsel %vm839, %v1982, %v2005
        %v2007 = vsel %vm702, %v1999, %v2000
        %v2008 = vsel %vm839, %v1986, %v2007
        %v2009 = vsel %vm702, %v2001, %v2002
        %v2010 = vsel %vm839, %v1990, %v2009
        %v2011 = vsel %vm702, %v2003, %v2004
        %v2012 = vsel %vm839, %v1994, %v2011
        %2017 = vst [vmem:[#allocation3 + $0x40] sm:$0xff] %v2006
        %2018 = vst [vmem:[#allocation3 + $0x48] sm:$0xff] %v2008
        %2019 = vst [vmem:[#allocation3 + $0x50] sm:$0xff] %v2010
        %2020 = vst [vmem:[#allocation3 + $0x58] sm:$0xff] %v2012
        %v2021 = vld [vmem:[#allocation2] sm:$0xff]
        %v2022 = vld [vmem:[#allocation2 + $0x8] sm:$0xf]
        %v2023 = vld [vmem:[#allocation2 + $0x10] sm:$0xff]
        %v2024 = vld [vmem:[#allocation2 + $0x18] sm:$0xf]
        %v2025 = vld [vmem:[#allocation2 + $0x20] sm:$0xff]
        %v2026 = vld [vmem:[#allocation2 + $0x28] sm:$0xf]
        %v2027 = vld [vmem:[#allocation2 + $0x30] sm:$0xff]
        %v2028 = vld [vmem:[#allocation2 + $0x38] sm:$0xf]
        %v2029 = vsel %vm868, %v2021, 0
        %v2030 = vsel %vm869, %v2022, 0
        %v2031 = vsel %vm868, %v2023, 0
        %v2032 = vsel %vm869, %v2024, 0
        %v2033 = vsel %vm868, %v2025, 0
        %v2034 = vsel %vm869, %v2026, 0
        %v2035 = vsel %vm868, %v2027, 0
        %v2036 = vsel %vm869, %v2028, 0
        %2045 = vrot.lane.b32.xlu0 %v2029, 1
        %v2046 = vpop.permute.xlu0 %2045
        %2047 = vrot.lane.b32.xlu0 %v2030, 1
        %v2048 = vpop.permute.xlu0 %2047
        %2049 = vrot.lane.b32.xlu0 %v2031, 1
        %v2050 = vpop.permute.xlu0 %2049
        %2051 = vrot.lane.b32.xlu0 %v2032, 1
        %v2052 = vpop.permute.xlu0 %2051
        %2053 = vrot.lane.b32.xlu0 %v2033, 1
        %v2054 = vpop.permute.xlu0 %2053
        %2055 = vrot.lane.b32.xlu0 %v2034, 1
        %v2056 = vpop.permute.xlu0 %2055
        %2057 = vrot.lane.b32.xlu0 %v2035, 1
        %v2058 = vpop.permute.xlu0 %2057
        %2059 = vrot.lane.b32.xlu0 %v2036, 1
        %v2060 = vpop.permute.xlu0 %2059
        %v2061 = vrot.slane %v2046, 4
        %v2062 = vrot.slane %v2048, 4
        %v2063 = vrot.slane %v2050, 4
        %v2064 = vrot.slane %v2052, 4
        %v2065 = vrot.slane %v2054, 4
        %v2066 = vrot.slane %v2056, 4
        %v2067 = vrot.slane %v2058, 4
        %v2068 = vrot.slane %v2060, 4
        %v2069 = vsel %vm702, %v2061, %v2062
        %v2070 = vsel %vm911, %v2046, %v2069
        %v2071 = vsel %vm702, %v2063, %v2064
        %v2072 = vsel %vm911, %v2050, %v2071
        %v2073 = vsel %vm702, %v2065, %v2066
        %v2074 = vsel %vm911, %v2054, %v2073
        %v2075 = vsel %vm702, %v2067, %v2068
        %v2076 = vsel %vm911, %v2058, %v2075
        %2081 = vst [vmem:[#allocation3 + $0x60] sm:$0xff] %v2070
        %2082 = vst [vmem:[#allocation3 + $0x68] sm:$0xff] %v2072
        %2083 = vst [vmem:[#allocation3 + $0x70] sm:$0xff] %v2074
        %2084 = vst [vmem:[#allocation3 + $0x78] sm:$0xff] %v2076
        %v2085 = vld [vmem:[#allocation2 + $0x4] sm:$0xff]
        %v2086 = vld [vmem:[#allocation2 + $0x14] sm:$0xff]
        %v2087 = vld [vmem:[#allocation2 + $0x24] sm:$0xff]
        %v2088 = vld [vmem:[#allocation2 + $0x34] sm:$0xff]
        %2089 = vst [vmem:[#allocation3 + $0x80] sm:$0xff] %v2085
        %2090 = vst [vmem:[#allocation3 + $0x88] sm:$0xff] %v2086
        %2091 = vst [vmem:[#allocation3 + $0x90] sm:$0xff] %v2087
        %2092 = vst [vmem:[#allocation3 + $0x98] sm:$0xff] %v2088
        %v2093 = vld [vmem:[#allocation2 + $0x4] sm:$0xff]
        %v2094 = vld [vmem:[#allocation2 + $0xc] sm:$0xf]
        %v2095 = vld [vmem:[#allocation2 + $0x14] sm:$0xff]
        %v2096 = vld [vmem:[#allocation2 + $0x1c] sm:$0xf]
        %v2097 = vld [vmem:[#allocation2 + $0x24] sm:$0xff]
        %v2098 = vld [vmem:[#allocation2 + $0x2c] sm:$0xf]
        %v2099 = vld [vmem:[#allocation2 + $0x34] sm:$0xff]
        %v2100 = vld [vmem:[#allocation2 + $0x3c] sm:$0xf]
        %v2101 = vsel %vm947, %v2093, 0
        %v2102 = vsel %vm948, %v2094, 0
        %v2103 = vsel %vm947, %v2095, 0
        %v2104 = vsel %vm948, %v2096, 0
        %v2105 = vsel %vm947, %v2097, 0
        %v2106 = vsel %vm948, %v2098, 0
        %v2107 = vsel %vm947, %v2099, 0
        %v2108 = vsel %vm948, %v2100, 0
        %2117 = vrot.lane.b32.xlu0 %v2101, 127
        %v2118 = vpop.permute.xlu0 %2117
        %2119 = vrot.lane.b32.xlu0 %v2102, 127
        %v2120 = vpop.permute.xlu0 %2119
        %2121 = vrot.lane.b32.xlu0 %v2103, 127
        %v2122 = vpop.permute.xlu0 %2121
        %2123 = vrot.lane.b32.xlu0 %v2104, 127
        %v2124 = vpop.permute.xlu0 %2123
        %2125 = vrot.lane.b32.xlu0 %v2105, 127
        %v2126 = vpop.permute.xlu0 %2125
        %2127 = vrot.lane.b32.xlu0 %v2106, 127
        %v2128 = vpop.permute.xlu0 %2127
        %2129 = vrot.lane.b32.xlu0 %v2107, 127
        %v2130 = vpop.permute.xlu0 %2129
        %2131 = vrot.lane.b32.xlu0 %v2108, 127
        %v2132 = vpop.permute.xlu0 %2131
        %v2133 = vrot.slane %v2118, 4
        %v2134 = vrot.slane %v2120, 4
        %v2135 = vrot.slane %v2122, 4
        %v2136 = vrot.slane %v2124, 4
        %v2137 = vrot.slane %v2126, 4
        %v2138 = vrot.slane %v2128, 4
        %v2139 = vrot.slane %v2130, 4
        %v2140 = vrot.slane %v2132, 4
        %v2141 = vsel %vm702, %v2133, %v2134
        %v2142 = vsel %vm866, %v2118, %v2141
        %v2143 = vsel %vm702, %v2135, %v2136
        %v2144 = vsel %vm866, %v2122, %v2143
        %v2145 = vsel %vm702, %v2137, %v2138
        %v2146 = vsel %vm866, %v2126, %v2145
        %v2147 = vsel %vm702, %v2139, %v2140
        %v2148 = vsel %vm866, %v2130, %v2147
        %2153 = vst [vmem:[#allocation3 + $0xa0] sm:$0xff] %v2142
        %2154 = vst [vmem:[#allocation3 + $0xa8] sm:$0xff] %v2144
        %2155 = vst [vmem:[#allocation3 + $0xb0] sm:$0xff] %v2146
        %2156 = vst [vmem:[#allocation3 + $0xb8] sm:$0xff] %v2148
        %v2157 = vld [vmem:[#allocation2 + $0x4] sm:$0xff]
        %v2158 = vld [vmem:[#allocation2 + $0xc] sm:$0xf]
        %v2159 = vld [vmem:[#allocation2 + $0x14] sm:$0xff]
        %v2160 = vld [vmem:[#allocation2 + $0x1c] sm:$0xf]
        %v2161 = vld [vmem:[#allocation2 + $0x24] sm:$0xff]
        %v2162 = vld [vmem:[#allocation2 + $0x2c] sm:$0xf]
        %v2163 = vld [vmem:[#allocation2 + $0x34] sm:$0xff]
        %v2164 = vld [vmem:[#allocation2 + $0x3c] sm:$0xf]
        %v2165 = vsel %vm1017, %v2157, 0
        %v2166 = vsel %vm1018, %v2158, 0
        %v2167 = vsel %vm1017, %v2159, 0
        %v2168 = vsel %vm1018, %v2160, 0
        %v2169 = vsel %vm1017, %v2161, 0
        %v2170 = vsel %vm1018, %v2162, 0
        %v2171 = vsel %vm1017, %v2163, 0
        %v2172 = vsel %vm1018, %v2164, 0
        %2181 = vrot.lane.b32.xlu0 %v2165, 113
        %v2182 = vpop.permute.xlu0 %2181
        %2183 = vrot.lane.b32.xlu0 %v2166, 113
        %v2184 = vpop.permute.xlu0 %2183
        %2185 = vrot.lane.b32.xlu0 %v2167, 113
        %v2186 = vpop.permute.xlu0 %2185
        %2187 = vrot.lane.b32.xlu0 %v2168, 113
        %v2188 = vpop.permute.xlu0 %2187
        %2189 = vrot.lane.b32.xlu0 %v2169, 113
        %v2190 = vpop.permute.xlu0 %2189
        %2191 = vrot.lane.b32.xlu0 %v2170, 113
        %v2192 = vpop.permute.xlu0 %2191
        %2193 = vrot.lane.b32.xlu0 %v2171, 113
        %v2194 = vpop.permute.xlu0 %2193
        %2195 = vrot.lane.b32.xlu0 %v2172, 113
        %v2196 = vpop.permute.xlu0 %2195
        %v2197 = vrot.slane %v2182, 4
        %v2198 = vrot.slane %v2184, 4
        %v2199 = vrot.slane %v2186, 4
        %v2200 = vrot.slane %v2188, 4
        %v2201 = vrot.slane %v2190, 4
        %v2202 = vrot.slane %v2192, 4
        %v2203 = vrot.slane %v2194, 4
        %v2204 = vrot.slane %v2196, 4
        %v2205 = vsel %vm702, %v2197, %v2198
        %v2206 = vsel %vm794, %v2182, %v2205
        %v2207 = vsel %vm702, %v2199, %v2200
        %v2208 = vsel %vm794, %v2186, %v2207
        %v2209 = vsel %vm702, %v2201, %v2202
        %v2210 = vsel %vm794, %v2190, %v2209
        %v2211 = vsel %vm702, %v2203, %v2204
        %v2212 = vsel %vm794, %v2194, %v2211
        %2217 = vst [vmem:[#allocation3 + $0xc0] sm:$0xff] %v2206
        %2218 = vst [vmem:[#allocation3 + $0xc8] sm:$0xff] %v2208
        %2219 = vst [vmem:[#allocation3 + $0xd0] sm:$0xff] %v2210
        %2220 = vst [vmem:[#allocation3 + $0xd8] sm:$0xff] %v2212
        %v2221 = vld [vmem:[#allocation2 + $0x4] sm:$0xff]
        %v2222 = vld [vmem:[#allocation2 + $0xc] sm:$0xf]
        %v2223 = vld [vmem:[#allocation2 + $0x14] sm:$0xff]
        %v2224 = vld [vmem:[#allocation2 + $0x1c] sm:$0xf]
        %v2225 = vld [vmem:[#allocation2 + $0x24] sm:$0xff]
        %v2226 = vld [vmem:[#allocation2 + $0x2c] sm:$0xf]
        %v2227 = vld [vmem:[#allocation2 + $0x34] sm:$0xff]
        %v2228 = vld [vmem:[#allocation2 + $0x3c] sm:$0xf]
        %2237 = vrot.lane.b32.xlu0 %v2221, 112
        %v2238 = vpop.permute.xlu0 %2237
        %2239 = vrot.lane.b32.xlu0 %v2222, 112
        %v2240 = vpop.permute.xlu0 %2239
        %2241 = vrot.lane.b32.xlu0 %v2223, 112
        %v2242 = vpop.permute.xlu0 %2241
        %2243 = vrot.lane.b32.xlu0 %v2224, 112
        %v2244 = vpop.permute.xlu0 %2243
        %2245 = vrot.lane.b32.xlu0 %v2225, 112
        %v2246 = vpop.permute.xlu0 %2245
        %2247 = vrot.lane.b32.xlu0 %v2226, 112
        %v2248 = vpop.permute.xlu0 %2247
        %2249 = vrot.lane.b32.xlu0 %v2227, 112
        %v2250 = vpop.permute.xlu0 %2249
        %2251 = vrot.lane.b32.xlu0 %v2228, 112
        %v2252 = vpop.permute.xlu0 %2251
        %v2253 = vrot.slane %v2238, 4
        %v2254 = vrot.slane %v2240, 4
        %v2255 = vrot.slane %v2242, 4
        %v2256 = vrot.slane %v2244, 4
        %v2257 = vrot.slane %v2246, 4
        %v2258 = vrot.slane %v2248, 4
        %v2259 = vrot.slane %v2250, 4
        %v2260 = vrot.slane %v2252, 4
        %v2261 = vsel %vm702, %v2253, %v2254
        %v2262 = vsel %vm1116, %v2238, %v2261
        %v2263 = vsel %vm702, %v2255, %v2256
        %v2264 = vsel %vm1116, %v2242, %v2263
        %v2265 = vsel %vm702, %v2257, %v2258
        %v2266 = vsel %vm1116, %v2246, %v2265
        %v2267 = vsel %vm702, %v2259, %v2260
        %v2268 = vsel %vm1116, %v2250, %v2267
        %2273 = vst [vmem:[#allocation3 + $0xe0] sm:$0xff] %v2262
        %2274 = vst [vmem:[#allocation3 + $0xe8] sm:$0xff] %v2264
        %2275 = vst [vmem:[#allocation3 + $0xf0] sm:$0xff] %v2266
        %2276 = vst [vmem:[#allocation3 + $0xf8] sm:$0xff] %v2268
        %v2277 = vld [vmem:[#allocation2 + $0x4] sm:$0xff]
        %v2278 = vld [vmem:[#allocation2 + $0xc] sm:$0xf]
        %v2279 = vld [vmem:[#allocation2 + $0x14] sm:$0xff]
        %v2280 = vld [vmem:[#allocation2 + $0x1c] sm:$0xf]
        %v2281 = vld [vmem:[#allocation2 + $0x24] sm:$0xff]
        %v2282 = vld [vmem:[#allocation2 + $0x2c] sm:$0xf]
        %v2283 = vld [vmem:[#allocation2 + $0x34] sm:$0xff]
        %v2284 = vld [vmem:[#allocation2 + $0x3c] sm:$0xf]
        %v2285 = vsel %vm1144, %v2277, 0
        %v2286 = vsel %vm1145, %v2278, 0
        %v2287 = vsel %vm1144, %v2279, 0
        %v2288 = vsel %vm1145, %v2280, 0
        %v2289 = vsel %vm1144, %v2281, 0
        %v2290 = vsel %vm1145, %v2282, 0
        %v2291 = vsel %vm1144, %v2283, 0
        %v2292 = vsel %vm1145, %v2284, 0
        %2301 = vrot.lane.b32.xlu0 %v2285, 111
        %v2302 = vpop.permute.xlu0 %2301
        %2303 = vrot.lane.b32.xlu0 %v2286, 111
        %v2304 = vpop.permute.xlu0 %2303
        %2305 = vrot.lane.b32.xlu0 %v2287, 111
        %v2306 = vpop.permute.xlu0 %2305
        %2307 = vrot.lane.b32.xlu0 %v2288, 111
        %v2308 = vpop.permute.xlu0 %2307
        %2309 = vrot.lane.b32.xlu0 %v2289, 111
        %v2310 = vpop.permute.xlu0 %2309
        %2311 = vrot.lane.b32.xlu0 %v2290, 111
        %v2312 = vpop.permute.xlu0 %2311
        %2313 = vrot.lane.b32.xlu0 %v2291, 111
        %v2314 = vpop.permute.xlu0 %2313
        %2315 = vrot.lane.b32.xlu0 %v2292, 111
        %v2316 = vpop.permute.xlu0 %2315
        %v2317 = vrot.slane %v2302, 4
        %v2318 = vrot.slane %v2304, 4
        %v2319 = vrot.slane %v2306, 4
        %v2320 = vrot.slane %v2308, 4
        %v2321 = vrot.slane %v2310, 4
        %v2322 = vrot.slane %v2312, 4
        %v2323 = vrot.slane %v2314, 4
        %v2324 = vrot.slane %v2316, 4
        %v2325 = vsel %vm702, %v2317, %v2318
        %v2326 = vsel %vm658, %v2302, %v2325
        %v2327 = vsel %vm702, %v2319, %v2320
        %v2328 = vsel %vm658, %v2306, %v2327
        %v2329 = vsel %vm702, %v2321, %v2322
        %v2330 = vsel %vm658, %v2310, %v2329
        %v2331 = vsel %vm702, %v2323, %v2324
        %v2332 = vsel %vm658, %v2314, %v2331
        %2337 = vst [vmem:[#allocation3 + $0x100] sm:$0xff] %v2326
        %2338 = vst [vmem:[#allocation3 + $0x108] sm:$0xff] %v2328
        %2339 = vst [vmem:[#allocation3 + $0x110] sm:$0xff] %v2330
        %2340 = vst [vmem:[#allocation3 + $0x118] sm:$0xff] %v2332
        %v2341 = vld [vmem:[%s8] sm:$0xff]
        %v2342 = vld [vmem:[%s8 + $0x8] sm:$0xf]
        %v2343 = vld [vmem:[%s8 + $0xc] sm:$0xff]
        %v2344 = vld [vmem:[%s8 + $0x14] sm:$0xf]
        %v2345 = vld [vmem:[%s8 + $0x18] sm:$0xff]
        %v2346 = vld [vmem:[%s8 + $0x20] sm:$0xf]
        %v2347 = vld [vmem:[%s8 + $0x24] sm:$0xff]
        %v2348 = vld [vmem:[%s8 + $0x2c] sm:$0xf]
        %v2349 = vld [vmem:[#allocation3] sm:$0xff]
        %v2350 = vld [vmem:[#allocation3 + $0x8] sm:$0xff]
        %v2351 = vld [vmem:[#allocation3 + $0x10] sm:$0xff]
        %v2352 = vld [vmem:[#allocation3 + $0x18] sm:$0xff]
        %v2353 = vld [vmem:[#allocation3 + $0x20] sm:$0xff]
        %v2354 = vld [vmem:[#allocation3 + $0x28] sm:$0xff]
        %v2355 = vld [vmem:[#allocation3 + $0x30] sm:$0xff]
        %v2356 = vld [vmem:[#allocation3 + $0x38] sm:$0xff]
        %v2357 = vld [vmem:[#allocation3 + $0x40] sm:$0xff]
        %v2358 = vld [vmem:[#allocation3 + $0x48] sm:$0xff]
        %v2359 = vld [vmem:[#allocation3 + $0x50] sm:$0xff]
        %v2360 = vld [vmem:[#allocation3 + $0x58] sm:$0xff]
        %v2361 = vld [vmem:[#allocation3 + $0x60] sm:$0xff]
        %v2362 = vld [vmem:[#allocation3 + $0x68] sm:$0xff]
        %v2363 = vld [vmem:[#allocation3 + $0x70] sm:$0xff]
        %v2364 = vld [vmem:[#allocation3 + $0x78] sm:$0xff]
        %v2365 = vld [vmem:[#allocation3 + $0x80] sm:$0xff]
        %v2366 = vld [vmem:[#allocation3 + $0x88] sm:$0xff]
        %v2367 = vld [vmem:[#allocation3 + $0x90] sm:$0xff]
        %v2368 = vld [vmem:[#allocation3 + $0x98] sm:$0xff]
        %v2369 = vld [vmem:[#allocation3 + $0xa0] sm:$0xff]
        %v2370 = vld [vmem:[#allocation3 + $0xa8] sm:$0xff]
        %v2371 = vld [vmem:[#allocation3 + $0xb0] sm:$0xff]
        %v2372 = vld [vmem:[#allocation3 + $0xb8] sm:$0xff]
        %v2373 = vld [vmem:[#allocation3 + $0xc0] sm:$0xff]
        %v2374 = vld [vmem:[#allocation3 + $0xc8] sm:$0xff]
        %v2375 = vld [vmem:[#allocation3 + $0xd0] sm:$0xff]
        %v2376 = vld [vmem:[#allocation3 + $0xd8] sm:$0xff]
        %v2377 = vld [vmem:[#allocation3 + $0xe0] sm:$0xff]
        %v2378 = vld [vmem:[#allocation3 + $0xe8] sm:$0xff]
        %v2379 = vld [vmem:[#allocation3 + $0xf0] sm:$0xff]
        %v2380 = vld [vmem:[#allocation3 + $0xf8] sm:$0xff]
        %v2381 = vld [vmem:[#allocation3 + $0x100] sm:$0xff]
        %v2382 = vld [vmem:[#allocation3 + $0x108] sm:$0xff]
        %v2383 = vld [vmem:[#allocation3 + $0x110] sm:$0xff]
        %v2384 = vld [vmem:[#allocation3 + $0x118] sm:$0xff]
        %v2385 = vld [vmem:[%s9] sm:$0xff]
        %v2386 = vld [vmem:[%s9 + $0x8] sm:$0xff]
        %v2387 = vld [vmem:[%s9 + $0x10] sm:$0xff]
        %v2388 = vld [vmem:[%s9 + $0x18] sm:$0xff]
        %2390 = vset.pattern.permute.xlu0 0
        %2391 = vperm.xlu0 %2390, %v2385
        %v2392 = vpop.permute.xlu0 %2391
        %2395 = vset.pattern.permute.xlu0 0
        %2396 = vperm.xlu0 %2395, %v2386
        %v2397 = vpop.permute.xlu0 %2396
        %2400 = vset.pattern.permute.xlu0 0
        %2401 = vperm.xlu0 %2400, %v2387
        %v2402 = vpop.permute.xlu0 %2401
        %2405 = vset.pattern.permute.xlu0 0
        %2406 = vperm.xlu0 %2405, %v2388
        %v2407 = vpop.permute.xlu0 %2406
        %v2417 = vunpack.c.l.b16 %v2341
        %v2418 = vunpack.c.h.b16 %v2341
        %v2419 = vunpack.c.l.b16 %v2342
        %v2420 = vunpack.c.l.b16 %v2343
        %v2421 = vunpack.c.h.b16 %v2343
        %v2422 = vunpack.c.l.b16 %v2344
        %v2423 = vunpack.c.l.b16 %v2345
        %v2424 = vunpack.c.h.b16 %v2345
        %v2425 = vunpack.c.l.b16 %v2346
        %v2426 = vunpack.c.l.b16 %v2347
        %v2427 = vunpack.c.h.b16 %v2347
        %v2428 = vunpack.c.l.b16 %v2348
        %v2429 = vpack.c.b16 %v2420, %v2417
        %v2430 = vpack.c.b16 %v2421, %v2418
        %v2431 = vpack.c.b16 %v2422, %v2419
        %v2432 = vpack.c.b16 %v2426, %v2423
        %v2433 = vpack.c.b16 %v2427, %v2424
        %v2434 = vpack.c.b16 %v2428, %v2425
        %v2475 = vunpack.c.l.b16 %v2349
        %v2476 = vunpack.c.h.b16 %v2349
        %v2477 = vunpack.c.l.b16 %v2350
        %v2478 = vunpack.c.h.b16 %v2350
        %v2479 = vunpack.c.l.b16 %v2351
        %v2480 = vunpack.c.h.b16 %v2351
        %v2481 = vunpack.c.l.b16 %v2352
        %v2482 = vunpack.c.h.b16 %v2352
        %v2483 = vunpack.c.l.b16 %v2353
        %v2484 = vunpack.c.h.b16 %v2353
        %v2485 = vunpack.c.l.b16 %v2354
        %v2486 = vunpack.c.h.b16 %v2354
        %v2487 = vunpack.c.l.b16 %v2355
        %v2488 = vunpack.c.h.b16 %v2355
        %v2489 = vunpack.c.l.b16 %v2356
        %v2490 = vunpack.c.h.b16 %v2356
        %v2491 = vunpack.c.l.b16 %v2357
        %v2492 = vunpack.c.h.b16 %v2357
        %v2493 = vunpack.c.l.b16 %v2358
        %v2494 = vunpack.c.h.b16 %v2358
        %v2495 = vunpack.c.l.b16 %v2359
        %v2496 = vunpack.c.h.b16 %v2359
        %v2497 = vunpack.c.l.b16 %v2360
        %v2498 = vunpack.c.h.b16 %v2360
        %v2499 = vunpack.c.l.b16 %v2361
        %v2500 = vunpack.c.h.b16 %v2361
        %v2501 = vunpack.c.l.b16 %v2362
        %v2502 = vunpack.c.h.b16 %v2362
        %v2503 = vunpack.c.l.b16 %v2363
        %v2504 = vunpack.c.h.b16 %v2363
        %v2505 = vunpack.c.l.b16 %v2364
        %v2506 = vunpack.c.h.b16 %v2364
        %v2507 = vunpack.c.l.b16 %v2365
        %v2508 = vunpack.c.h.b16 %v2365
        %v2509 = vunpack.c.l.b16 %v2366
        %v2510 = vunpack.c.h.b16 %v2366
        %v2511 = vunpack.c.l.b16 %v2367
        %v2512 = vunpack.c.h.b16 %v2367
        %v2513 = vunpack.c.l.b16 %v2368
        %v2514 = vunpack.c.h.b16 %v2368
        %v2515 = vunpack.c.l.b16 %v2369
        %v2516 = vunpack.c.h.b16 %v2369
        %v2517 = vunpack.c.l.b16 %v2370
        %v2518 = vunpack.c.h.b16 %v2370
        %v2519 = vunpack.c.l.b16 %v2371
        %v2520 = vunpack.c.h.b16 %v2371
        %v2521 = vunpack.c.l.b16 %v2372
        %v2522 = vunpack.c.h.b16 %v2372
        %v2523 = vunpack.c.l.b16 %v2373
        %v2524 = vunpack.c.h.b16 %v2373
        %v2525 = vunpack.c.l.b16 %v2374
        %v2526 = vunpack.c.h.b16 %v2374
        %v2527 = vunpack.c.l.b16 %v2375
        %v2528 = vunpack.c.h.b16 %v2375
        %v2529 = vunpack.c.l.b16 %v2376
        %v2530 = vunpack.c.h.b16 %v2376
        %v2531 = vunpack.c.l.b16 %v2377
        %v2532 = vunpack.c.h.b16 %v2377
        %v2533 = vunpack.c.l.b16 %v2378
        %v2534 = vunpack.c.h.b16 %v2378
        %v2535 = vunpack.c.l.b16 %v2379
        %v2536 = vunpack.c.h.b16 %v2379
        %v2537 = vunpack.c.l.b16 %v2380
        %v2538 = vunpack.c.h.b16 %v2380
        %v2539 = vunpack.c.l.b16 %v2381
        %v2540 = vunpack.c.h.b16 %v2381
        %v2541 = vunpack.c.l.b16 %v2382
        %v2542 = vunpack.c.h.b16 %v2382
        %v2543 = vunpack.c.l.b16 %v2383
        %v2544 = vunpack.c.h.b16 %v2383
        %v2545 = vunpack.c.l.b16 %v2384
        %v2546 = vunpack.c.h.b16 %v2384
        %v2547 = vpack.c.b16 %v2477, %v2475
        %v2548 = vpack.c.b16 %v2478, %v2476
        %v2549 = vpack.c.b16 %v2481, %v2479
        %v2550 = vpack.c.b16 %v2482, %v2480
        %v2551 = vpack.c.b16 %v2485, %v2483
        %v2552 = vpack.c.b16 %v2486, %v2484
        %v2553 = vpack.c.b16 %v2489, %v2487
        %v2554 = vpack.c.b16 %v2490, %v2488
        %v2555 = vpack.c.b16 %v2493, %v2491
        %v2556 = vpack.c.b16 %v2494, %v2492
        %v2557 = vpack.c.b16 %v2497, %v2495
        %v2558 = vpack.c.b16 %v2498, %v2496
        %v2559 = vpack.c.b16 %v2501, %v2499
        %v2560 = vpack.c.b16 %v2502, %v2500
        %v2561 = vpack.c.b16 %v2505, %v2503
        %v2562 = vpack.c.b16 %v2506, %v2504
        %v2563 = vpack.c.b16 %v2509, %v2507
        %v2564 = vpack.c.b16 %v2510, %v2508
        %v2565 = vpack.c.b16 %v2513, %v2511
        %v2566 = vpack.c.b16 %v2514, %v2512
        %v2567 = vpack.c.b16 %v2517, %v2515
        %v2568 = vpack.c.b16 %v2518, %v2516
        %v2569 = vpack.c.b16 %v2521, %v2519
        %v2570 = vpack.c.b16 %v2522, %v2520
        %v2571 = vpack.c.b16 %v2525, %v2523
        %v2572 = vpack.c.b16 %v2526, %v2524
        %v2573 = vpack.c.b16 %v2529, %v2527
        %v2574 = vpack.c.b16 %v2530, %v2528
        %v2575 = vpack.c.b16 %v2533, %v2531
        %v2576 = vpack.c.b16 %v2534, %v2532
        %v2577 = vpack.c.b16 %v2537, %v2535
        %v2578 = vpack.c.b16 %v2538, %v2536
        %v2579 = vpack.c.b16 %v2541, %v2539
        %v2580 = vpack.c.b16 %v2542, %v2540
        %v2581 = vpack.c.b16 %v2545, %v2543
        %v2582 = vpack.c.b16 %v2546, %v2544
        %v2620 = vsel %vm1480, %v2431, 0
        %v2623 = vsel %vm1480, %v2434, 0
        %2625 = vmatprep.subr.bf16.mxu0 %v2562
        %2626 = vmatpush1.bf16.msra.mxu0 %v2561
        %2627 = vmatprep.subr.bf16.mxu0 %v2560
        %2628 = vmatpush1.bf16.msra.mxu0 %v2559
        %2629 = vmatprep.subr.bf16.mxu0 %v2558
        %2630 = vmatpush1.bf16.msra.mxu0 %v2557
        %2631 = vmatprep.subr.bf16.mxu0 %v2556
        %2632 = vmatpush1.bf16.msra.mxu0 %v2555
        %2633 = vmatprep.subr.bf16.mxu0 %v2554
        %2634 = vmatpush1.bf16.msra.mxu0 %v2553
        %2635 = vmatprep.subr.bf16.mxu0 %v2552
        %2636 = vmatpush1.bf16.msra.mxu0 %v2551
        %2637 = vmatprep.subr.bf16.mxu0 %v2550
        %2638 = vmatpush1.bf16.msra.mxu0 %v2549
        %2639 = vmatprep.subr.bf16.mxu0 %v2548
        %2640 = vmatpush1.bf16.msra.mxu0 %v2547
        %2641 = vmatprep.subr.bf16.mxu0 %v2578
        %2642 = vmatpush2.bf16.msra.mxu0 %v2577
        %2643 = vmatprep.subr.bf16.mxu0 %v2576
        %2644 = vmatpush2.bf16.msra.mxu0 %v2575
        %2645 = vmatprep.subr.bf16.mxu0 %v2574
        %2646 = vmatpush2.bf16.msra.mxu0 %v2573
        %2647 = vmatprep.subr.bf16.mxu0 %v2572
        %2648 = vmatpush2.bf16.msra.mxu0 %v2571
        %2649 = vmatprep.subr.bf16.mxu0 %v2570
        %2650 = vmatpush2.bf16.msra.mxu0 %v2569
        %2651 = vmatprep.subr.bf16.mxu0 %v2568
        %2652 = vmatpush2.bf16.msra.mxu0 %v2567
        %2653 = vmatprep.subr.bf16.mxu0 %v2566
        %2654 = vmatpush2.bf16.msra.mxu0 %v2565
        %2655 = vmatprep.subr.bf16.mxu0 %v2564
        %2656 = vmatpush2.bf16.msra.mxu0 %v2563
        %2657 = vmatprep.mubr.bf16.mxu0 %v2430
        %2658 = vmatmul.mubr.bf16.gmra.mxu0 %v2429
        %v2659 = vpop.f32.mrf.mxu0
        %v2660 = vadd.f32 %v2392, %v2659
        %v2661 = vpop.f32.mrf.mxu0
        %v2662 = vadd.f32 %v2392, %v2661
        %v2663 = vpop.f32.mrf.mxu0
        %v2664 = vadd.f32 %v2397, %v2663
        %v2665 = vpop.f32.mrf.mxu0
        %v2666 = vadd.f32 %v2397, %v2665
        %2667 = vmatprep.mubr.bf16.mxu0 %v2433
        %2668 = vmatmul.mubr.bf16.gmra.mxu0 %v2432
        %v2669 = vpop.f32.mrf.mxu0
        %v2670 = vadd.f32 %v2402, %v2669
        %v2671 = vpop.f32.mrf.mxu0
        %v2672 = vadd.f32 %v2402, %v2671
        %v2673 = vpop.f32.mrf.mxu0
        %v2674 = vadd.f32 %v2407, %v2673
        %v2675 = vpop.f32.mrf.mxu0
        %v2676 = vadd.f32 %v2407, %v2675
        %2677 = vdwg.mxu0
        %2678 = vmatprep.subr.bf16.mxu0 0
        %2679 = vmatpush1.bf16.msra.mxu0 0
        %2680 = vmatprep.subr.bf16.mxu0 0
        %2681 = vmatpush1.bf16.msra.mxu0 0
        %2682 = vmatprep.subr.bf16.mxu0 0
        %2683 = vmatpush1.bf16.msra.mxu0 0
        %2684 = vmatprep.subr.bf16.mxu0 0
        %2685 = vmatpush1.bf16.msra.mxu0 0
        %2686 = vmatprep.subr.bf16.mxu0 0
        %2687 = vmatpush1.bf16.msra.mxu0 0
        %2688 = vmatprep.subr.bf16.mxu0 0
        %2689 = vmatpush1.bf16.msra.mxu0 0
        %2690 = vmatprep.subr.bf16.mxu0 %v2582
        %2691 = vmatpush1.bf16.msra.mxu0 %v2581
        %2692 = vmatprep.subr.bf16.mxu0 %v2580
        %2693 = vmatpush1.bf16.msra.mxu0 %v2579
        %2694 = vmatprep.subr.bf16.mxu0 0
        %2695 = vmatpush2.bf16.msra.mxu0 0
        %2696 = vmatprep.subr.bf16.mxu0 0
        %2697 = vmatpush2.bf16.msra.mxu0 0
        %2698 = vmatprep.subr.bf16.mxu0 0
        %2699 = vmatpush2.bf16.msra.mxu0 0
        %2700 = vmatprep.subr.bf16.mxu0 0
        %2701 = vmatpush2.bf16.msra.mxu0 0
        %2702 = vmatprep.subr.bf16.mxu0 0
        %2703 = vmatpush2.bf16.msra.mxu0 0
        %2704 = vmatprep.subr.bf16.mxu0 0
        %2705 = vmatpush2.bf16.msra.mxu0 0
        %2706 = vmatprep.subr.bf16.mxu0 0
        %2707 = vmatpush2.bf16.msra.mxu0 0
        %2708 = vmatprep.subr.bf16.mxu0 0
        %2709 = vmatpush2.bf16.msra.mxu0 0
        %2710 = vmatprep.mubr.bf16.mxu0 0
        %2711 = vmatmul.mubr.bf16.gmra.mxu0 %v2620
        %v2712 = vpop.f32.mrf.mxu0
        %v2713 = vadd.f32 %v2660, %v2712
        %v2714 = vpop.f32.mrf.mxu0
        %v2715 = vadd.f32 %v2662, %v2714
        %v2716 = vpop.f32.mrf.mxu0
        %v2717 = vadd.f32 %v2664, %v2716
        %v2718 = vpop.f32.mrf.mxu0
        %v2719 = vadd.f32 %v2666, %v2718
        %2720 = vmatprep.mubr.bf16.mxu0 0
        %2721 = vmatmul.mubr.bf16.gmra.mxu0 %v2623
        %v2722 = vpop.f32.mrf.mxu0
        %v2723 = vadd.f32 %v2670, %v2722
        %v2724 = vpop.f32.mrf.mxu0
        %v2725 = vadd.f32 %v2672, %v2724
        %v2726 = vpop.f32.mrf.mxu0
        %v2727 = vadd.f32 %v2674, %v2726
        %v2728 = vpop.f32.mrf.mxu0
        %v2729 = vadd.f32 %v2676, %v2728
        %2730 = vdwg.mxu0
        %v2731 = vld [vmem:[%s372] sm:$0xff]
        %v2732 = vld [vmem:[%s372 + $0x8] sm:$0xff]
        %v2733 = vld [vmem:[%s372 + $0x10] sm:$0xff]
        %v2734 = vld [vmem:[%s372 + $0x18] sm:$0xff]
        %v2735 = vld [vmem:[%s372 + $0x20] sm:$0xff]
        %v2736 = vld [vmem:[%s372 + $0x28] sm:$0xff]
        %v2737 = vld [vmem:[%s372 + $0x30] sm:$0xff]
        %v2738 = vld [vmem:[%s372 + $0x38] sm:$0xff]
        %v2739 = vadd.f32 %v2731, %v2713
        %v2740 = vadd.f32 %v2732, %v2715
        %v2741 = vadd.f32 %v2733, %v2717
        %v2742 = vadd.f32 %v2734, %v2719
        %v2743 = vadd.f32 %v2735, %v2723
        %v2744 = vadd.f32 %v2736, %v2725
        %v2745 = vadd.f32 %v2737, %v2727
        %v2746 = vadd.f32 %v2738, %v2729
        %2747 = vst [vmem:[%s367] sm:$0xff] %v2739
        %2748 = vst [vmem:[%s367 + $0x8] sm:$0xff] %v2740
        %2749 = vst [vmem:[%s367 + $0x10] sm:$0xff] %v2741
        %2750 = vst [vmem:[%s367 + $0x18] sm:$0xff] %v2742
        %2751 = vst [vmem:[%s367 + $0x20] sm:$0xff] %v2743
        %2752 = vst [vmem:[%s367 + $0x28] sm:$0xff] %v2744
        %2753 = vst [vmem:[%s367 + $0x30] sm:$0xff] %v2745
        %2754 = vst [vmem:[%s367 + $0x38] sm:$0xff] %v2746
        %s2755 = sand.u32 %s252, 1
        %s2756 = scalar_lea.sflag [#allocation5], %s2755
        %s2757 = sand.u32 %s252, 1
        %s2758 = smul.addr %s2757, 64
        %s2759 = scalar_lea.vmem [#allocation4], %s2758
        // Predicated region
        $region61: #{tpu_custom_call.1} parent=59 // pred_check
          %p2760 = pneg %p262
        $region62: #{tpu_custom_call.1} parent=59 // pred_check_branch
          %2762 = sbr.rel (%p2760) target = $region64
        $region63: #{tpu_custom_call.1} parent=59 // pred_region
          %s2764 = ssub.s32 1024, 1024
          %2765 = vsyncadd %s2756, %s2764
          %s2766 = smul.addr %s24, 8
          %s2767 = smul.addr %s2766, 128
          %s2768 = scalar_lea.hbm %s10, %s2767
          %s2769 = sshll.u32 %s2759, 4
          %s2770 = int_to_ptr.vmem [resolvable:$true] %s2769
          %2775 = dma.vmem_to_hbm [thread:$0]  %s2770, 1024, %s2768, %s2756, 256, 256, 16
        $region64: #{tpu_custom_call.1} parent=59 // pred_fallthru
          _
      $region60: #{tpu_custom_call.1} parent=5 // pred_fallthru
        _
      %p2776 = scmp.le.s32.totalorder 2, %s19
      // Predicated region
      $region65: #{tpu_custom_call.1} parent=5 // pred_check
        %p2777 = pneg %p2776
      $region66: #{tpu_custom_call.1} parent=5 // pred_check_branch
        %2779 = sbr.rel (%p2777) target = $region68
      $region67: #{tpu_custom_call.1} parent=5 // pred_region
        %s2780 = ssub.s32 %s19, 2
        // Predicated region
        $region69: #{tpu_custom_call.1} parent=67 // pred_check
          %p2781 = pneg %p268
        $region70: #{tpu_custom_call.1} parent=67 // pred_check_branch
          %2783 = sbr.rel (%p2781) target = $region72
        $region71: #{tpu_custom_call.1} parent=67 // pred_region
          %s2784 = sand.u32 %s253, 1
          %s2785 = scalar_lea.sflag [#allocation5], %s2784
          %s2786 = sand.u32 %s253, 1
          %s2787 = smul.addr %s2786, 64
          %s2788 = scalar_lea.vmem [#allocation4], %s2787
          %2789 = dma.done %s2785, 1024
        $region72: #{tpu_custom_call.1} parent=67 // pred_fallthru
          _
      $region68: #{tpu_custom_call.1} parent=5 // pred_fallthru
        _
    $region6: #{tpu_custom_call.1} parent=1 // loop_footer
      %s23 = sadd.s32 1, %s19
    $region7: #{tpu_custom_call.1} parent=1 // loop_footer_branch
      %18 = sbr.rel target = $region3
    $region8: #{tpu_custom_call.1} parent=1 // loop_exit
      _
    %2790 = vsyncpa [#allocation5], 1
    %s2791 = scalar_lea.sflag [#allocation5], 1
    %2792 = vsyncpa %s2791, 1

</llo_original>
